<compile_context>
chip_gen: v6e
topology: v6e:2x2x1
jax: 0.10.0
libtpu: 0.0.40
codegen_flags: <defaults>
</compile_context>

<pallas_src>
import math

import jax
import jax.numpy as jnp
from jax.experimental import pallas as pl
from jax.experimental.pallas import tpu as pltpu

LANE = 128


def _align(n, m=LANE):
    return ((n + m - 1) // m) * m


def init_params(key, input_size, hidden_size, output_size, n_layers):
    """Deterministic parameter init mirroring the shapes of the PyTorch module
    (linear / GRU weights pre-transposed to (in_features, out_features))."""
    I, H, O, L = input_size, hidden_size, output_size, n_layers
    keys = iter(jax.random.split(key, 64))

    def unif(shape, bound):
        return jax.random.uniform(next(keys), shape, jnp.float32, -bound, bound)

    bI = 1.0 / math.sqrt(I)
    bH = 1.0 / math.sqrt(H)

    params = {
        "i2d_w": unif((I, H), bI),      # nn.Linear(input_size, hidden)
        "i2d_b": unif((1, H), bI),
        "mu2_w": unif((H, O), bH),      # nn.Linear(hidden, output)
        "mu2_b": unif((1, O), bH),
        "sigma2_w": unif((H, O), bH),
        "sigma2_b": unif((1, O), bH),
    }
    for name in ("gru", "mu1", "sigma1"):   # three stacked-GRU blocks
        params[name + "_wih"] = unif((L, H, 3 * H), bH)
        params[name + "_whh"] = unif((L, H, 3 * H), bH)
        params[name + "_bih"] = unif((L, 1, 3 * H), bH)
        params[name + "_bhh"] = unif((L, 1, 3 * H), bH)
    return params


def pack_params(params, *, ntype, n_layers, hidden_size, output_size, batch_size,
                weight_dtype=jnp.float32):
    """One-time (trace-time) repack of the PyTorch-shaped params into lane-aligned,
    fused operands.  All gate blocks / activations are padded to PAD = align(2H) lanes."""
    H, O, L = hidden_size, output_size, n_layers
    I = params["i2d_w"].shape[0]
    f32 = jnp.float32

    PAD = _align(2 * H)          # lane width of every gate block / activation / state
    OP = _align(2 * O)           # lane width of the fused output head
    GB = 4 * PAD                 # per-layer gate columns: [r | z | gi_n | gh_n]

    offs = {"PAD": PAD, "OP": OP, "GB": GB}
    cur = 0
    offs["i2d"] = cur
    cur += PAD
    if ntype == 2:
        offs["g"] = cur
        cur += L * GB
    offs["ms"] = cur
    cur += L * GB
    offs["out"] = cur
    cur += OP
    offs["total"] = cur

    bias = jnp.zeros((1, offs["total"]), f32)
    bias = bias.at[0, offs["i2d"]:offs["i2d"] + H].set(params["i2d_b"][0])

    # i2d weight, columns zero-padded to PAD lanes (relu(0)=0 keeps pad lanes at 0).
    i2d_w = jnp.zeros((I, PAD), f32).at[:, 0:H].set(params["i2d_w"])

    def common_layer(wih, whh, bih, bhh):
        # Common GRU: gate g lives at column block g*PAD (r->0, z->1, gi_n->2, gh_n->3).
        wx = jnp.zeros((PAD, GB), f32)
        wh = jnp.zeros((PAD, GB), f32)
        for g, (colx, colh) in enumerate(((0, 0), (PAD, PAD), (2 * PAD, 3 * PAD))):
            gi = slice(g * H, (g + 1) * H)
            wx = wx.at[0:H, colx:colx + H].set(wih[:, gi])
            wh = wh.at[0:H, colh:colh + H].set(whh[:, gi])
        b = jnp.zeros((GB,), f32)
        b = b.at[0:H].set(bih[0, 0:H] + bhh[0, 0:H])
        b = b.at[PAD:PAD + H].set(bih[0, H:2 * H] + bhh[0, H:2 * H])
        b = b.at[2 * PAD:2 * PAD + H].set(bih[0, 2 * H:3 * H])
        b = b.at[3 * PAD:3 * PAD + H].set(bhh[0, 2 * H:3 * H])
        return wx, wh, b

    def dual_layer(l, mwih, mwhh, mbih, mbhh, swih, swhh, sbih, sbhh):
        # Fused mu/sigma GRU layer.  Within each 128-lane gate block: [mu(0:H) | sig(H:2H)].
        # Layer 0 input is the shared `cur` (rows 0:H carry BOTH heads' columns);
        # layers >0 take [o_mu | o_sig] (block-diagonal rows per head).
        wx = jnp.zeros((PAD, GB), f32)
        wh = jnp.zeros((PAD, GB), f32)
        sig_in_rows = slice(0, H) if l == 0 else slice(H, 2 * H)
        for g, (colx, colh) in enumerate(((0, 0), (PAD, PAD), (2 * PAD, 3 * PAD))):
            gi = slice(g * H, (g + 1) * H)
            wx = wx.at[0:H, colx:colx + H].set(mwih[:, gi])
            wx = wx.at[sig_in_rows, colx + H:colx + 2 * H].set(swih[:, gi])
            wh = wh.at[0:H, colh:colh + H].set(mwhh[:, gi])
            wh = wh.at[H:2 * H, colh + H:colh + 2 * H].set(swhh[:, gi])
        b = jnp.zeros((GB,), f32)
        b = b.at[0:H].set(mbih[0, 0:H] + mbhh[0, 0:H])
        b = b.at[H:2 * H].set(sbih[0, 0:H] + sbhh[0, 0:H])
        b = b.at[PAD:PAD + H].set(mbih[0, H:2 * H] + mbhh[0, H:2 * H])
        b = b.at[PAD + H:PAD + 2 * H].set(sbih[0, H:2 * H] + sbhh[0, H:2 * H])
        b = b.at[2 * PAD:2 * PAD + H].set(mbih[0, 2 * H:3 * H])
        b = b.at[2 * PAD + H:2 * PAD + 2 * H].set(sbih[0, 2 * H:3 * H])
        b = b.at[3 * PAD:3 * PAD + H].set(mbhh[0, 2 * H:3 * H])
        b = b.at[3 * PAD + H:3 * PAD + 2 * H].set(sbhh[0, 2 * H:3 * H])
        return wx, wh, b

    packed = {"offs": offs, "i2d_w": i2d_w.astype(weight_dtype)}

    if ntype == 2:
        wxs, whs = [], []
        for l in range(L):
            wx, wh, b = common_layer(params["gru_wih"][l], params["gru_whh"][l],
                                     params["gru_bih"][l], params["gru_bhh"][l])
            wxs.append(wx)
            whs.append(wh)
            o = offs["g"] + l * GB
            bias = bias.at[0, o:o + GB].set(b)
        packed["g_wx"] = jnp.stack(wxs).astype(weight_dtype)
        packed["g_wh"] = jnp.stack(whs).astype(weight_dtype)

    wxs, whs = [], []
    for l in range(L):
        wx, wh, b = dual_layer(l,
                               params["mu1_wih"][l], params["mu1_whh"][l],
                               params["mu1_bih"][l], params["mu1_bhh"][l],
                               params["sigma1_wih"][l], params["sigma1_whh"][l],
                               params["sigma1_bih"][l], params["sigma1_bhh"][l])
        wxs.append(wx)
        whs.append(wh)
        o = offs["ms"] + l * GB
        bias = bias.at[0, o:o + GB].set(b)
    packed["ms_wx"] = jnp.stack(wxs).astype(weight_dtype)
    packed["ms_wh"] = jnp.stack(whs).astype(weight_dtype)

    # Fused output head, padded to OP lanes for a lane-dense (unmasked) store.
    out_w = jnp.zeros((PAD, OP), f32)
    out_w = out_w.at[0:H, 0:O].set(params["mu2_w"])
    out_w = out_w.at[H:2 * H, O:2 * O].set(params["sigma2_w"])
    packed["out_w"] = out_w.astype(weight_dtype)

    bias = bias.at[0, offs["out"]:offs["out"] + O].set(params["mu2_b"][0])
    bias = bias.at[0, offs["out"] + O:offs["out"] + 2 * O].set(params["sigma2_b"][0])
    # Pre-replicate to B sublanes so in-kernel bias adds are plain full-vreg adds
    # (no per-layer broadcast_in_dim in the unrolled loop).
    packed["bias"] = jnp.tile(bias, (batch_size, 1))
    return packed


def seperate_mean_var_forward(x, hidden, packed, *, ntype, n_layers, hidden_size,
                              output_size, beta=1.0):
    """Pallas implementation of SeperateMeanVar.forward (seq_len == 1)."""
    B, I = x.shape
    H, O, L = hidden_size, output_size, n_layers
    f32 = jnp.float32
    offs = packed["offs"]
    PAD, OP, GB = offs["PAD"], offs["OP"], offs["GB"]
    assert packed["bias"].shape[0] == B, "pack_params batch_size must match x batch"

    h_gru, h_mu, h_sig = hidden
    # Pack the hidden state into the lane-padded kernel layout (zeros in pad lanes stay
    # exactly zero through the GRU update, so the slices taken after the call are exact).
    ms_pad = PAD - 2 * H
    parts = [h_mu, h_sig]
    if ms_pad:
        parts.append(jnp.zeros((L, B, ms_pad), f32))
    h_ms = jnp.concatenate(parts, axis=-1)                         # (L, B, PAD)
    if ntype == 2:
        h_g = jnp.concatenate([h_gru, jnp.zeros((L, B, PAD - H), f32)], axis=-1)

    def _sigmoid(v):
        # sigmoid(v) == 0.5*tanh(0.5*v)+0.5: a single EUP push instead of exp+reciprocal.
        return 0.5 * jnp.tanh(0.5 * v) + 0.5

    def _gru_step(inp, h_prev, wx, wh, b):
        # Two small dots instead of dot(concat([inp, h]), W): lane concatenation is off
        # the serial chain; both dots overlap in the MXU result FIFO.
        g = (jnp.dot(inp.astype(wx.dtype), wx, preferred_element_type=f32)
             + jnp.dot(h_prev.astype(wh.dtype), wh, preferred_element_type=f32)
             + b)
        rz = _sigmoid(g[:, 0:2 * PAD])                 # [r | z], 128-aligned blocks
        r, z = rz[:, 0:PAD], rz[:, PAD:2 * PAD]
        n = jnp.tanh(g[:, 2 * PAD:3 * PAD] + r * g[:, 3 * PAD:4 * PAD])
        return n + z * (h_prev - n)                    # == (1-z)*n + z*h

    def _head(x_ref, i2dw_ref, b_all):
        w = i2dw_ref[...]
        return jnp.maximum(
            jnp.dot(x_ref[...].astype(w.dtype), w, preferred_element_type=f32)
            + b_all[:, offs["i2d"]:offs["i2d"] + PAD], 0.0)

    def _tail(cur, outw, b_all, out_ref):
        out_ref[...] = (jnp.dot(cur.astype(outw.dtype), outw,
                                preferred_element_type=f32)
                        + b_all[:, offs["out"]:offs["out"] + OP])

    if ntype == 2:
        def kernel(x_ref, hg_ref, hms_ref, i2dw_ref, gwx_ref, gwh_ref,
                   mswx_ref, mswh_ref, outw_ref, b_ref,
                   out_ref, hgo_ref, hmso_ref):
            b_all = b_ref[...]
            cur = _head(x_ref, i2dw_ref, b_all)
            for l in range(L):                              # common GRU stack
                o = offs["g"] + l * GB
                cur = _gru_step(cur, hg_ref[l], gwx_ref[l], gwh_ref[l],
                                b_all[:, o:o + GB])
                hgo_ref[l] = cur
            for l in range(L):                              # fused mu/sigma GRU stack
                o = offs["ms"] + l * GB
                cur = _gru_step(cur, hms_ref[l], mswx_ref[l], mswh_ref[l],
                                b_all[:, o:o + GB])
                hmso_ref[l] = cur
            _tail(cur, outw_ref[...], b_all, out_ref)

        args = (x, h_g, h_ms, packed["i2d_w"], packed["g_wx"], packed["g_wh"],
                packed["ms_wx"], packed["ms_wh"], packed["out_w"], packed["bias"])
        out_shapes = (jax.ShapeDtypeStruct((B, OP), f32),
                      jax.ShapeDtypeStruct((L, B, PAD), f32),
                      jax.ShapeDtypeStruct((L, B, PAD), f32))
        n_stacks = 2
    else:
        def kernel(x_ref, hms_ref, i2dw_ref, mswx_ref, mswh_ref, outw_ref, b_ref,
                   out_ref, hmso_ref):
            b_all = b_ref[...]
            cur = _head(x_ref, i2dw_ref, b_all)
            for l in range(L):                              # fused mu/sigma GRU stack
                o = offs["ms"] + l * GB
                cur = _gru_step(cur, hms_ref[l], mswx_ref[l], mswh_ref[l],
                                b_all[:, o:o + GB])
                hmso_ref[l] = cur
            _tail(cur, outw_ref[...], b_all, out_ref)

        args = (x, h_ms, packed["i2d_w"], packed["ms_wx"], packed["ms_wh"],
                packed["out_w"], packed["bias"])
        out_shapes = (jax.ShapeDtypeStruct((B, OP), f32),
                      jax.ShapeDtypeStruct((L, B, PAD), f32))
        n_stacks = 1

    flops = (2 * B * I * PAD
             + n_stacks * L * 2 * (2 * B * PAD * GB)        # two dots per layer
             + 2 * B * PAD * OP)
    trans = n_stacks * L * 3 * B * PAD                      # one tanh per gate block
    bytes_accessed = (sum(int(a.size) * a.dtype.itemsize for a in args)
                      + sum(4 * math.prod(s.shape) for s in out_shapes))
    cost = pl.CostEstimate(flops=int(flops), transcendentals=int(trans),
                           bytes_accessed=int(bytes_accessed))

    outs = pl.pallas_call(
        kernel,
        out_shape=out_shapes,
        in_specs=[pl.BlockSpec(memory_space=pltpu.MemorySpace.VMEM) for _ in args],
        out_specs=tuple(pl.BlockSpec(memory_space=pltpu.MemorySpace.VMEM)
                        for _ in out_shapes),
        cost_estimate=cost,
    )(*args)

    if ntype == 2:
        out, hgo, hmso = outs
        hidden1 = hgo[:, :, :H]
    else:
        out, hmso = outs
        hidden1 = None                       # matches the PyTorch ntype != 2 branch
    mu, sigma = out[:, :O], out[:, O:2 * O]
    hidden2, hidden3 = hmso[:, :, :H], hmso[:, :, H:2 * H]
    return (mu, sigma, beta), (hidden1, hidden2, hidden3)


def reference_forward(x, hidden, params, *, ntype, n_layers, hidden_size, beta=1.0):
    """Pure-JAX reference (same math, no Pallas, unfused params) for correctness checking."""
    H, L = hidden_size, n_layers
    h_gru, h_mu, h_sig = hidden

    def gru_stack(cur, h0, wih, whh, bih, bhh):
        outs = []
        for l in range(L):
            h_prev = h0[l]
            gi = cur @ wih[l] + bih[l]
            gh = h_prev @ whh[l] + bhh[l]
            r = jax.nn.sigmoid(gi[:, :H] + gh[:, :H])
            z = jax.nn.sigmoid(gi[:, H:2 * H] + gh[:, H:2 * H])
            n = jnp.tanh(gi[:, 2 * H:] + r * gh[:, 2 * H:])
            cur = (1.0 - z) * n + z * h_prev
            outs.append(cur)
        return cur, jnp.stack(outs, axis=0)

    h1 = jax.nn.relu(x @ params["i2d_w"] + params["i2d_b"])
    if ntype == 2:
        h1, hidden1 = gru_stack(h1, h_gru, params["gru_wih"], params["gru_whh"],
                                params["gru_bih"], params["gru_bhh"])
    else:
        hidden1 = None
    mu1out, hidden2 = gru_stack(h1, h_mu, params["mu1_wih"], params["mu1_whh"],
                                params["mu1_bih"], params["mu1_bhh"])
    sg1out, hidden3 = gru_stack(h1, h_sig, params["sigma1_wih"], params["sigma1_whh"],
                                params["sigma1_bih"], params["sigma1_bhh"])
    mu = mu1out @ params["mu2_w"] + params["mu2_b"]
    sigma = sg1out @ params["sigma2_w"] + params["sigma2_b"]
    return (mu, sigma, beta), (hidden1, hidden2, hidden3)


if __name__ == "__main__":
    # B=8 fills the f32 sublanes; per-call latency is nearly flat in B, so throughput-
    # oriented callers should batch toward MXU row counts (128 on v5e, 256 on v6e/v7x).
    B, INPUT, HIDDEN, OUTPUT, LAYERS = 8, 16, 32, 8, 2

    key = jax.random.PRNGKey(0)
    k_par, k_x, k_h0, k_h1, k_h2 = jax.random.split(key, 5)

    params = init_params(k_par, INPUT, HIDDEN, OUTPUT, LAYERS)
    x = jax.random.normal(k_x, (B, INPUT), jnp.float32)
    hidden = (
        jax.random.normal(k_h0, (LAYERS, B, HIDDEN), jnp.float32),  # hidden[0] -> common gru
        jax.random.normal(k_h1, (LAYERS, B, HIDDEN), jnp.float32),  # hidden[1] -> mu1
        jax.random.normal(k_h2, (LAYERS, B, HIDDEN), jnp.float32),  # hidden[2] -> sigma1
    )

    tol = dict(atol=1e-4, rtol=1e-4)
    for ntype in (2, 1):
        packed = pack_params(params, ntype=ntype, n_layers=LAYERS,
                             hidden_size=HIDDEN, output_size=OUTPUT, batch_size=B)
        (mu, sigma, beta), (h1, h2, h3) = seperate_mean_var_forward(
            x, hidden, packed, ntype=ntype, n_layers=LAYERS,
            hidden_size=HIDDEN, output_size=OUTPUT, beta=1.0)
        jax.block_until_ready((mu, sigma, h2, h3))

        (mu_r, sg_r, _), (h1_r, h2_r, h3_r) = reference_forward(
            x, hidden, params, ntype=ntype, n_layers=LAYERS, hidden_size=HIDDEN)

        assert jnp.allclose(mu, mu_r, **tol), f"mu mismatch (ntype={ntype})"
        assert jnp.allclose(sigma, sg_r, **tol), f"sigma mismatch (ntype={ntype})"
        if ntype == 2:
            assert jnp.allclose(h1, h1_r, **tol), "hidden1 mismatch"
        else:
            assert h1 is None and h1_r is None
        assert jnp.allclose(h2, h2_r, **tol), f"hidden2 mismatch (ntype={ntype})"
        assert jnp.allclose(h3, h3_r, **tol), f"hidden3 mismatch (ntype={ntype})"
        assert beta == 1.0

    print("KERNEL_OK")
</pallas_src>

<mosaic_0001>
module attributes {stable_mosaic.version = 11 : i64} {
  func.func @kernel(%arg0: memref<8x16xf32, #tpu.memory_space<vmem>>, %arg1: memref<2x8x128xf32, #tpu.memory_space<vmem>>, %arg2: memref<2x8x128xf32, #tpu.memory_space<vmem>>, %arg3: memref<16x128xf32, #tpu.memory_space<vmem>>, %arg4: memref<2x128x512xf32, #tpu.memory_space<vmem>>, %arg5: memref<2x128x512xf32, #tpu.memory_space<vmem>>, %arg6: memref<2x128x512xf32, #tpu.memory_space<vmem>>, %arg7: memref<2x128x512xf32, #tpu.memory_space<vmem>>, %arg8: memref<128x128xf32, #tpu.memory_space<vmem>>, %arg9: memref<8x2304xf32, #tpu.memory_space<vmem>>, %arg10: memref<8x128xf32, #tpu.memory_space<vmem>>, %arg11: memref<2x8x128xf32, #tpu.memory_space<vmem>>, %arg12: memref<2x8x128xf32, #tpu.memory_space<vmem>>) attributes {dimension_semantics = [], scalar_prefetch = 0 : i64, scratch_operands = 0 : i64, tpu.core_type = #tpu.core_type<tc>} {
    %c0 = arith.constant 0 : index
    %c0_0 = arith.constant 0 : index
    %0 = vector.load %arg9[%c0, %c0_0] : memref<8x2304xf32, #tpu.memory_space<vmem>>, vector<8x2304xf32>
    %c0_1 = arith.constant 0 : index
    %c0_2 = arith.constant 0 : index
    %1 = vector.load %arg3[%c0_1, %c0_2] : memref<16x128xf32, #tpu.memory_space<vmem>>, vector<16x128xf32>
    %c0_3 = arith.constant 0 : index
    %c0_4 = arith.constant 0 : index
    %2 = vector.load %arg0[%c0_3, %c0_4] : memref<8x16xf32, #tpu.memory_space<vmem>>, vector<8x16xf32>
    %cst = arith.constant dense<0.000000e+00> : vector<8x128xf32>
    %3 = tpu.matmul %2, %1, %cst {dimension_numbers = #tpu.dot_dimension_numbers<[1], [0], [0], [1], [0, 0, 1, 1], [], []>} : vector<8x16xf32>, vector<16x128xf32>, vector<8x128xf32> -> vector<8x128xf32>
    %4 = vector.extract_strided_slice %0 {offsets = [0, 0], sizes = [8, 128], strides = [1, 1]} : vector<8x2304xf32> to vector<8x128xf32>
    %5 = arith.addf %3, %4 : vector<8x128xf32>
    %cst_5 = arith.constant 0.000000e+00 : f32
    %6 = vector.broadcast %cst_5 : f32 to vector<8x128xf32>
    %7 = arith.maximumf %5, %6 : vector<8x128xf32>
    %c0_6 = arith.constant 0 : index
    %c0_7 = arith.constant 0 : index
    %c0_8 = arith.constant 0 : index
    %8 = vector.load %arg1[%c0_6, %c0_7, %c0_8] : memref<2x8x128xf32, #tpu.memory_space<vmem>>, vector<1x8x128xf32>
    %9 = vector.shape_cast %8 : vector<1x8x128xf32> to vector<8x128xf32>
    %c0_9 = arith.constant 0 : index
    %c0_10 = arith.constant 0 : index
    %c0_11 = arith.constant 0 : index
    %10 = vector.load %arg4[%c0_9, %c0_10, %c0_11] : memref<2x128x512xf32, #tpu.memory_space<vmem>>, vector<1x128x512xf32>
    %11 = vector.shape_cast %10 : vector<1x128x512xf32> to vector<128x512xf32>
    %c0_12 = arith.constant 0 : index
    %c0_13 = arith.constant 0 : index
    %c0_14 = arith.constant 0 : index
    %12 = vector.load %arg5[%c0_12, %c0_13, %c0_14] : memref<2x128x512xf32, #tpu.memory_space<vmem>>, vector<1x128x512xf32>
    %13 = vector.shape_cast %12 : vector<1x128x512xf32> to vector<128x512xf32>
    %14 = vector.extract_strided_slice %0 {offsets = [0, 128], sizes = [8, 512], strides = [1, 1]} : vector<8x2304xf32> to vector<8x512xf32>
    %cst_15 = arith.constant dense<0.000000e+00> : vector<8x512xf32>
    %15 = tpu.matmul %7, %11, %cst_15 {dimension_numbers = #tpu.dot_dimension_numbers<[1], [0], [0], [1], [0, 0, 1, 1], [], []>} : vector<8x128xf32>, vector<128x512xf32>, vector<8x512xf32> -> vector<8x512xf32>
    %cst_16 = arith.constant dense<0.000000e+00> : vector<8x512xf32>
    %16 = tpu.matmul %9, %13, %cst_16 {dimension_numbers = #tpu.dot_dimension_numbers<[1], [0], [0], [1], [0, 0, 1, 1], [], []>} : vector<8x128xf32>, vector<128x512xf32>, vector<8x512xf32> -> vector<8x512xf32>
    %17 = arith.addf %15, %16 : vector<8x512xf32>
    %18 = arith.addf %17, %14 : vector<8x512xf32>
    %19 = vector.extract_strided_slice %18 {offsets = [0, 0], sizes = [8, 256], strides = [1, 1]} : vector<8x512xf32> to vector<8x256xf32>
    %cst_17 = arith.constant 5.000000e-01 : f32
    %20 = vector.broadcast %cst_17 : f32 to vector<8x256xf32>
    %21 = arith.mulf %20, %19 : vector<8x256xf32>
    %22 = math.tanh %21 : vector<8x256xf32>
    %cst_18 = arith.constant 5.000000e-01 : f32
    %23 = vector.broadcast %cst_18 : f32 to vector<8x256xf32>
    %24 = arith.mulf %23, %22 : vector<8x256xf32>
    %cst_19 = arith.constant 5.000000e-01 : f32
    %25 = vector.broadcast %cst_19 : f32 to vector<8x256xf32>
    %26 = arith.addf %24, %25 : vector<8x256xf32>
    %27 = vector.extract_strided_slice %26 {offsets = [0, 0], sizes = [8, 128], strides = [1, 1]} : vector<8x256xf32> to vector<8x128xf32>
    %28 = vector.extract_strided_slice %26 {offsets = [0, 128], sizes = [8, 128], strides = [1, 1]} : vector<8x256xf32> to vector<8x128xf32>
    %29 = vector.extract_strided_slice %18 {offsets = [0, 256], sizes = [8, 128], strides = [1, 1]} : vector<8x512xf32> to vector<8x128xf32>
    %30 = vector.extract_strided_slice %18 {offsets = [0, 384], sizes = [8, 128], strides = [1, 1]} : vector<8x512xf32> to vector<8x128xf32>
    %31 = arith.mulf %27, %30 : vector<8x128xf32>
    %32 = arith.addf %29, %31 : vector<8x128xf32>
    %33 = math.tanh %32 : vector<8x128xf32>
    %34 = arith.subf %9, %33 : vector<8x128xf32>
    %35 = arith.mulf %28, %34 : vector<8x128xf32>
    %36 = arith.addf %33, %35 : vector<8x128xf32>
    %c0_20 = arith.constant 0 : index
    %c0_21 = arith.constant 0 : index
    %c0_22 = arith.constant 0 : index
    %37 = vector.load %arg11[%c0_20, %c0_21, %c0_22] : memref<2x8x128xf32, #tpu.memory_space<vmem>>, vector<1x8x128xf32>
    %38 = vector.shape_cast %37 : vector<1x8x128xf32> to vector<8x128xf32>
    %39 = vector.shape_cast %36 : vector<8x128xf32> to vector<1x8x128xf32>
    tpu.vector_store %arg11[%c0_20, %c0_21, %c0_22], %39 {strides = array<i32>} : memref<2x8x128xf32, #tpu.memory_space<vmem>>, vector<1x8x128xf32>,
    %c1 = arith.constant 1 : index
    %c0_23 = arith.constant 0 : index
    %c0_24 = arith.constant 0 : index
    %40 = vector.load %arg1[%c1, %c0_23, %c0_24] : memref<2x8x128xf32, #tpu.memory_space<vmem>>, vector<1x8x128xf32>
    %41 = vector.shape_cast %40 : vector<1x8x128xf32> to vector<8x128xf32>
    %c1_25 = arith.constant 1 : index
    %c0_26 = arith.constant 0 : index
    %c0_27 = arith.constant 0 : index
    %42 = vector.load %arg4[%c1_25, %c0_26, %c0_27] : memref<2x128x512xf32, #tpu.memory_space<vmem>>, vector<1x128x512xf32>
    %43 = vector.shape_cast %42 : vector<1x128x512xf32> to vector<128x512xf32>
    %c1_28 = arith.constant 1 : index
    %c0_29 = arith.constant 0 : index
    %c0_30 = arith.constant 0 : index
    %44 = vector.load %arg5[%c1_28, %c0_29, %c0_30] : memref<2x128x512xf32, #tpu.memory_space<vmem>>, vector<1x128x512xf32>
    %45 = vector.shape_cast %44 : vector<1x128x512xf32> to vector<128x512xf32>
    %46 = vector.extract_strided_slice %0 {offsets = [0, 640], sizes = [8, 512], strides = [1, 1]} : vector<8x2304xf32> to vector<8x512xf32>
    %cst_31 = arith.constant dense<0.000000e+00> : vector<8x512xf32>
    %47 = tpu.matmul %36, %43, %cst_31 {dimension_numbers = #tpu.dot_dimension_numbers<[1], [0], [0], [1], [0, 0, 1, 1], [], []>} : vector<8x128xf32>, vector<128x512xf32>, vector<8x512xf32> -> vector<8x512xf32>
    %cst_32 = arith.constant dense<0.000000e+00> : vector<8x512xf32>
    %48 = tpu.matmul %41, %45, %cst_32 {dimension_numbers = #tpu.dot_dimension_numbers<[1], [0], [0], [1], [0, 0, 1, 1], [], []>} : vector<8x128xf32>, vector<128x512xf32>, vector<8x512xf32> -> vector<8x512xf32>
    %49 = arith.addf %47, %48 : vector<8x512xf32>
    %50 = arith.addf %49, %46 : vector<8x512xf32>
    %51 = vector.extract_strided_slice %50 {offsets = [0, 0], sizes = [8, 256], strides = [1, 1]} : vector<8x512xf32> to vector<8x256xf32>
    %cst_33 = arith.constant 5.000000e-01 : f32
    %52 = vector.broadcast %cst_33 : f32 to vector<8x256xf32>
    %53 = arith.mulf %52, %51 : vector<8x256xf32>
    %54 = math.tanh %53 : vector<8x256xf32>
    %cst_34 = arith.constant 5.000000e-01 : f32
    %55 = vector.broadcast %cst_34 : f32 to vector<8x256xf32>
    %56 = arith.mulf %55, %54 : vector<8x256xf32>
    %cst_35 = arith.constant 5.000000e-01 : f32
    %57 = vector.broadcast %cst_35 : f32 to vector<8x256xf32>
    %58 = arith.addf %56, %57 : vector<8x256xf32>
    %59 = vector.extract_strided_slice %58 {offsets = [0, 0], sizes = [8, 128], strides = [1, 1]} : vector<8x256xf32> to vector<8x128xf32>
    %60 = vector.extract_strided_slice %58 {offsets = [0, 128], sizes = [8, 128], strides = [1, 1]} : vector<8x256xf32> to vector<8x128xf32>
    %61 = vector.extract_strided_slice %50 {offsets = [0, 256], sizes = [8, 128], strides = [1, 1]} : vector<8x512xf32> to vector<8x128xf32>
    %62 = vector.extract_strided_slice %50 {offsets = [0, 384], sizes = [8, 128], strides = [1, 1]} : vector<8x512xf32> to vector<8x128xf32>
    %63 = arith.mulf %59, %62 : vector<8x128xf32>
    %64 = arith.addf %61, %63 : vector<8x128xf32>
    %65 = math.tanh %64 : vector<8x128xf32>
    %66 = arith.subf %41, %65 : vector<8x128xf32>
    %67 = arith.mulf %60, %66 : vector<8x128xf32>
    %68 = arith.addf %65, %67 : vector<8x128xf32>
    %c1_36 = arith.constant 1 : index
    %c0_37 = arith.constant 0 : index
    %c0_38 = arith.constant 0 : index
    %69 = vector.load %arg11[%c1_36, %c0_37, %c0_38] : memref<2x8x128xf32, #tpu.memory_space<vmem>>, vector<1x8x128xf32>
    %70 = vector.shape_cast %69 : vector<1x8x128xf32> to vector<8x128xf32>
    %71 = vector.shape_cast %68 : vector<8x128xf32> to vector<1x8x128xf32>
    tpu.vector_store %arg11[%c1_36, %c0_37, %c0_38], %71 {strides = array<i32>} : memref<2x8x128xf32, #tpu.memory_space<vmem>>, vector<1x8x128xf32>,
    %c0_39 = arith.constant 0 : index
    %c0_40 = arith.constant 0 : index
    %c0_41 = arith.constant 0 : index
    %72 = vector.load %arg2[%c0_39, %c0_40, %c0_41] : memref<2x8x128xf32, #tpu.memory_space<vmem>>, vector<1x8x128xf32>
    %73 = vector.shape_cast %72 : vector<1x8x128xf32> to vector<8x128xf32>
    %c0_42 = arith.constant 0 : index
    %c0_43 = arith.constant 0 : index
    %c0_44 = arith.constant 0 : index
    %74 = vector.load %arg6[%c0_42, %c0_43, %c0_44] : memref<2x128x512xf32, #tpu.memory_space<vmem>>, vector<1x128x512xf32>
    %75 = vector.shape_cast %74 : vector<1x128x512xf32> to vector<128x512xf32>
    %c0_45 = arith.constant 0 : index
    %c0_46 = arith.constant 0 : index
    %c0_47 = arith.constant 0 : index
    %76 = vector.load %arg7[%c0_45, %c0_46, %c0_47] : memref<2x128x512xf32, #tpu.memory_space<vmem>>, vector<1x128x512xf32>
    %77 = vector.shape_cast %76 : vector<1x128x512xf32> to vector<128x512xf32>
    %78 = vector.extract_strided_slice %0 {offsets = [0, 1152], sizes = [8, 512], strides = [1, 1]} : vector<8x2304xf32> to vector<8x512xf32>
    %cst_48 = arith.constant dense<0.000000e+00> : vector<8x512xf32>
    %79 = tpu.matmul %68, %75, %cst_48 {dimension_numbers = #tpu.dot_dimension_numbers<[1], [0], [0], [1], [0, 0, 1, 1], [], []>} : vector<8x128xf32>, vector<128x512xf32>, vector<8x512xf32> -> vector<8x512xf32>
    %cst_49 = arith.constant dense<0.000000e+00> : vector<8x512xf32>
    %80 = tpu.matmul %73, %77, %cst_49 {dimension_numbers = #tpu.dot_dimension_numbers<[1], [0], [0], [1], [0, 0, 1, 1], [], []>} : vector<8x128xf32>, vector<128x512xf32>, vector<8x512xf32> -> vector<8x512xf32>
    %81 = arith.addf %79, %80 : vector<8x512xf32>
    %82 = arith.addf %81, %78 : vector<8x512xf32>
    %83 = vector.extract_strided_slice %82 {offsets = [0, 0], sizes = [8, 256], strides = [1, 1]} : vector<8x512xf32> to vector<8x256xf32>
    %cst_50 = arith.constant 5.000000e-01 : f32
    %84 = vector.broadcast %cst_50 : f32 to vector<8x256xf32>
    %85 = arith.mulf %84, %83 : vector<8x256xf32>
    %86 = math.tanh %85 : vector<8x256xf32>
    %cst_51 = arith.constant 5.000000e-01 : f32
    %87 = vector.broadcast %cst_51 : f32 to vector<8x256xf32>
    %88 = arith.mulf %87, %86 : vector<8x256xf32>
    %cst_52 = arith.constant 5.000000e-01 : f32
    %89 = vector.broadcast %cst_52 : f32 to vector<8x256xf32>
    %90 = arith.addf %88, %89 : vector<8x256xf32>
    %91 = vector.extract_strided_slice %90 {offsets = [0, 0], sizes = [8, 128], strides = [1, 1]} : vector<8x256xf32> to vector<8x128xf32>
    %92 = vector.extract_strided_slice %90 {offsets = [0, 128], sizes = [8, 128], strides = [1, 1]} : vector<8x256xf32> to vector<8x128xf32>
    %93 = vector.extract_strided_slice %82 {offsets = [0, 256], sizes = [8, 128], strides = [1, 1]} : vector<8x512xf32> to vector<8x128xf32>
    %94 = vector.extract_strided_slice %82 {offsets = [0, 384], sizes = [8, 128], strides = [1, 1]} : vector<8x512xf32> to vector<8x128xf32>
    %95 = arith.mulf %91, %94 : vector<8x128xf32>
    %96 = arith.addf %93, %95 : vector<8x128xf32>
    %97 = math.tanh %96 : vector<8x128xf32>
    %98 = arith.subf %73, %97 : vector<8x128xf32>
    %99 = arith.mulf %92, %98 : vector<8x128xf32>
    %100 = arith.addf %97, %99 : vector<8x128xf32>
    %c0_53 = arith.constant 0 : index
    %c0_54 = arith.constant 0 : index
    %c0_55 = arith.constant 0 : index
    %101 = vector.load %arg12[%c0_53, %c0_54, %c0_55] : memref<2x8x128xf32, #tpu.memory_space<vmem>>, vector<1x8x128xf32>
    %102 = vector.shape_cast %101 : vector<1x8x128xf32> to vector<8x128xf32>
    %103 = vector.shape_cast %100 : vector<8x128xf32> to vector<1x8x128xf32>
    tpu.vector_store %arg12[%c0_53, %c0_54, %c0_55], %103 {strides = array<i32>} : memref<2x8x128xf32, #tpu.memory_space<vmem>>, vector<1x8x128xf32>,
    %c1_56 = arith.constant 1 : index
    %c0_57 = arith.constant 0 : index
    %c0_58 = arith.constant 0 : index
    %104 = vector.load %arg2[%c1_56, %c0_57, %c0_58] : memref<2x8x128xf32, #tpu.memory_space<vmem>>, vector<1x8x128xf32>
    %105 = vector.shape_cast %104 : vector<1x8x128xf32> to vector<8x128xf32>
    %c1_59 = arith.constant 1 : index
    %c0_60 = arith.constant 0 : index
    %c0_61 = arith.constant 0 : index
    %106 = vector.load %arg6[%c1_59, %c0_60, %c0_61] : memref<2x128x512xf32, #tpu.memory_space<vmem>>, vector<1x128x512xf32>
    %107 = vector.shape_cast %106 : vector<1x128x512xf32> to vector<128x512xf32>
    %c1_62 = arith.constant 1 : index
    %c0_63 = arith.constant 0 : index
    %c0_64 = arith.constant 0 : index
    %108 = vector.load %arg7[%c1_62, %c0_63, %c0_64] : memref<2x128x512xf32, #tpu.memory_space<vmem>>, vector<1x128x512xf32>
    %109 = vector.shape_cast %108 : vector<1x128x512xf32> to vector<128x512xf32>
    %110 = vector.extract_strided_slice %0 {offsets = [0, 1664], sizes = [8, 512], strides = [1, 1]} : vector<8x2304xf32> to vector<8x512xf32>
    %cst_65 = arith.constant dense<0.000000e+00> : vector<8x512xf32>
    %111 = tpu.matmul %100, %107, %cst_65 {dimension_numbers = #tpu.dot_dimension_numbers<[1], [0], [0], [1], [0, 0, 1, 1], [], []>} : vector<8x128xf32>, vector<128x512xf32>, vector<8x512xf32> -> vector<8x512xf32>
    %cst_66 = arith.constant dense<0.000000e+00> : vector<8x512xf32>
    %112 = tpu.matmul %105, %109, %cst_66 {dimension_numbers = #tpu.dot_dimension_numbers<[1], [0], [0], [1], [0, 0, 1, 1], [], []>} : vector<8x128xf32>, vector<128x512xf32>, vector<8x512xf32> -> vector<8x512xf32>
    %113 = arith.addf %111, %112 : vector<8x512xf32>
    %114 = arith.addf %113, %110 : vector<8x512xf32>
    %115 = vector.extract_strided_slice %114 {offsets = [0, 0], sizes = [8, 256], strides = [1, 1]} : vector<8x512xf32> to vector<8x256xf32>
    %cst_67 = arith.constant 5.000000e-01 : f32
    %116 = vector.broadcast %cst_67 : f32 to vector<8x256xf32>
    %117 = arith.mulf %116, %115 : vector<8x256xf32>
    %118 = math.tanh %117 : vector<8x256xf32>
    %cst_68 = arith.constant 5.000000e-01 : f32
    %119 = vector.broadcast %cst_68 : f32 to vector<8x256xf32>
    %120 = arith.mulf %119, %118 : vector<8x256xf32>
    %cst_69 = arith.constant 5.000000e-01 : f32
    %121 = vector.broadcast %cst_69 : f32 to vector<8x256xf32>
    %122 = arith.addf %120, %121 : vector<8x256xf32>
    %123 = vector.extract_strided_slice %122 {offsets = [0, 0], sizes = [8, 128], strides = [1, 1]} : vector<8x256xf32> to vector<8x128xf32>
    %124 = vector.extract_strided_slice %122 {offsets = [0, 128], sizes = [8, 128], strides = [1, 1]} : vector<8x256xf32> to vector<8x128xf32>
    %125 = vector.extract_strided_slice %114 {offsets = [0, 256], sizes = [8, 128], strides = [1, 1]} : vector<8x512xf32> to vector<8x128xf32>
    %126 = vector.extract_strided_slice %114 {offsets = [0, 384], sizes = [8, 128], strides = [1, 1]} : vector<8x512xf32> to vector<8x128xf32>
    %127 = arith.mulf %123, %126 : vector<8x128xf32>
    %128 = arith.addf %125, %127 : vector<8x128xf32>
    %129 = math.tanh %128 : vector<8x128xf32>
    %130 = arith.subf %105, %129 : vector<8x128xf32>
    %131 = arith.mulf %124, %130 : vector<8x128xf32>
    %132 = arith.addf %129, %131 : vector<8x128xf32>
    %c1_70 = arith.constant 1 : index
    %c0_71 = arith.constant 0 : index
    %c0_72 = arith.constant 0 : index
    %133 = vector.load %arg12[%c1_70, %c0_71, %c0_72] : memref<2x8x128xf32, #tpu.memory_space<vmem>>, vector<1x8x128xf32>
    %134 = vector.shape_cast %133 : vector<1x8x128xf32> to vector<8x128xf32>
    %135 = vector.shape_cast %132 : vector<8x128xf32> to vector<1x8x128xf32>
    tpu.vector_store %arg12[%c1_70, %c0_71, %c0_72], %135 {strides = array<i32>} : memref<2x8x128xf32, #tpu.memory_space<vmem>>, vector<1x8x128xf32>,
    %c0_73 = arith.constant 0 : index
    %c0_74 = arith.constant 0 : index
    %136 = vector.load %arg8[%c0_73, %c0_74] : memref<128x128xf32, #tpu.memory_space<vmem>>, vector<128x128xf32>
    %cst_75 = arith.constant dense<0.000000e+00> : vector<8x128xf32>
    %137 = tpu.matmul %132, %136, %cst_75 {dimension_numbers = #tpu.dot_dimension_numbers<[1], [0], [0], [1], [0, 0, 1, 1], [], []>} : vector<8x128xf32>, vector<128x128xf32>, vector<8x128xf32> -> vector<8x128xf32>
    %138 = vector.extract_strided_slice %0 {offsets = [0, 2176], sizes = [8, 128], strides = [1, 1]} : vector<8x2304xf32> to vector<8x128xf32>
    %139 = arith.addf %137, %138 : vector<8x128xf32>
    %c0_76 = arith.constant 0 : index
    %c0_77 = arith.constant 0 : index
    %140 = vector.load %arg10[%c0_76, %c0_77] : memref<8x128xf32, #tpu.memory_space<vmem>>, vector<8x128xf32>
    tpu.vector_store %arg10[%c0_76, %c0_77], %139 {strides = array<i32>} : memref<8x128xf32, #tpu.memory_space<vmem>>, vector<8x128xf32>,
    return
  }
}

</mosaic_0001>

<llo_original>
// kernel: tpu_custom_call.1
$region0: #{tpu_custom_call.1}
  #allocation0 [shape = 'u32[]', space=smem, size = 0x4, offset = 0x4, fixed_abs, tag = 'smem constant byte address 0x4 - core index']
  #allocation1 [shape = 'u32[144,128]{1,0:T(1,128)}', space=vmem, size = 0x12000, scoped, tag = 'internal scratch']
  %s0 = inlined_call_operand.hbm [shape: f32[8,16], index: 0, kind: input, shape index: {}]
  %s1 = inlined_call_operand.hbm [shape: f32[2,8,128], index: 1, kind: input, shape index: {}]
  %s2 = inlined_call_operand.hbm [shape: f32[2,8,128], index: 2, kind: input, shape index: {}]
  %s3 = inlined_call_operand.hbm [shape: f32[16,128], index: 3, kind: input, shape index: {}]
  %s4 = inlined_call_operand.hbm [shape: f32[2,128,512], index: 4, kind: input, shape index: {}]
  %s5 = inlined_call_operand.hbm [shape: f32[2,128,512], index: 5, kind: input, shape index: {}]
  %s6 = inlined_call_operand.hbm [shape: f32[2,128,512], index: 6, kind: input, shape index: {}]
  %s7 = inlined_call_operand.hbm [shape: f32[2,128,512], index: 7, kind: input, shape index: {}]
  %s8 = inlined_call_operand.hbm [shape: f32[128,128], index: 8, kind: input, shape index: {}]
  %s9 = inlined_call_operand.hbm [shape: f32[8,2304], index: 9, kind: input, shape index: {}]
  %s10 = inlined_call_operand.hbm [shape: f32[8,128], index: 10, kind: output, shape index: {0}]
  %s11 = inlined_call_operand.hbm [shape: f32[2,8,128], index: 11, kind: output, shape index: {1}]
  %s12 = inlined_call_operand.hbm [shape: f32[2,8,128], index: 12, kind: output, shape index: {2}]
  %13 = xla_tuple %s10, %s11, %s12
  %s14 = sld [smem:[#allocation0]]
  $region106: #{tpu_custom_call.1} parent=0
    _
  %s16 = ssub.s32 1, %s14
  %s17 = scalar_select 0, %s16, %s14
  $region1: #{tpu_custom_call.1} parent=0
    #allocation2 [shape = 'u8[4096]{0}', space=vmem, size = 0x1000, scoped, tag = 'input window, operand 0, single buffered']
    #allocation3 [shape = 's32[1]{0}', space=sflag, size = 0x4, scoped, tag = 'scoped memory for tpu_custom_call.1']
    #allocation4 [shape = 's32[1]{0}', space=sflag, size = 0x4, scoped, tag = 'scoped memory for tpu_custom_call.1']
    #allocation5 [shape = 'u8[8192]{0}', space=vmem, size = 0x2000, scoped, tag = 'input window, operand 1, single buffered']
    #allocation6 [shape = 's32[1]{0}', space=sflag, size = 0x4, scoped, tag = 'scoped memory for tpu_custom_call.1']
    #allocation7 [shape = 'u8[8192]{0}', space=vmem, size = 0x2000, scoped, tag = 'input window, operand 2, single buffered']
    #allocation8 [shape = 'u8[8192]{0}', space=vmem, size = 0x2000, scoped, tag = 'input window, operand 3, single buffered']
    #allocation9 [shape = 's32[1]{0}', space=sflag, size = 0x4, scoped, tag = 'scoped memory for tpu_custom_call.1']
    #allocation10 [shape = 'u8[524288]{0}', space=vmem, size = 0x80000, scoped, tag = 'input window, operand 4, single buffered']
    #allocation11 [shape = 'u8[524288]{0}', space=vmem, size = 0x80000, scoped, tag = 'input window, operand 5, single buffered']
    #allocation12 [shape = 's32[1]{0}', space=sflag, size = 0x4, scoped, tag = 'scoped memory for tpu_custom_call.1']
    #allocation13 [shape = 'u8[524288]{0}', space=vmem, size = 0x80000, scoped, tag = 'input window, operand 6, single buffered']
    #allocation14 [shape = 'u8[524288]{0}', space=vmem, size = 0x80000, scoped, tag = 'input window, operand 7, single buffered']
    #allocation15 [shape = 's32[1]{0}', space=sflag, size = 0x4, scoped, tag = 'scoped memory for tpu_custom_call.1']
    #allocation16 [shape = 'u8[65536]{0}', space=vmem, size = 0x10000, scoped, tag = 'input window, operand 8, single buffered']
    #allocation17 [shape = 'u8[73728]{0}', space=vmem, size = 0x12000, scoped, tag = 'input window, operand 9, single buffered']
    #allocation18 [shape = 's32[1]{0}', space=sflag, size = 0x4, scoped, tag = 'scoped memory for tpu_custom_call.1']
    #allocation19 [shape = 'u8[4096]{0}', space=vmem, size = 0x1000, scoped, tag = 'output window, operand 0, single buffered']
    #allocation20 [shape = 'u8[8192]{0}', space=vmem, size = 0x2000, scoped, tag = 'output window, operand 1, single buffered']
    #allocation21 [shape = 's32[1]{0}', space=sflag, size = 0x4, scoped, tag = 'scoped memory for tpu_custom_call.1']
    #allocation22 [shape = 'u8[8192]{0}', space=vmem, size = 0x2000, scoped, tag = 'output window, operand 2, single buffered']
    %18 = vsyncpa [#allocation3], 0
    %19 = vsyncpa [#allocation6], 0
    %20 = vsyncpa [#allocation9], 0
    %21 = vsyncpa [#allocation12], 0
    %22 = vsyncpa [#allocation15], 0
    %23 = vsyncpa [#allocation18], 0
    %24 = vsyncpa [#allocation4], 0
    %25 = vsyncpa [#allocation21], 0
    // Predicated region
    $region2: #{tpu_custom_call.1} parent=1 // pred_check
      _
    $region3: #{tpu_custom_call.1} parent=1 // pred_check_branch
      %27 = sbr.rel (0) target = $region5
    $region4: #{tpu_custom_call.1} parent=1 // pred_region
      %s29 = ssub.s32 128, 128
      %30 = vsyncadd [#allocation3], %s29
      %s32 = sshll.u32 [#allocation2], 4
      %s33 = int_to_ptr.vmem [resolvable:$true] %s32
      %35 = dma.hbm_to_vmem [thread:$0]  %s0, 128, %s33, [#allocation3]
    $region5: #{tpu_custom_call.1} parent=1 // pred_fallthru
      _
    // Predicated region
    $region6: #{tpu_custom_call.1} parent=1 // pred_check
      _
    $region7: #{tpu_custom_call.1} parent=1 // pred_check_branch
      %37 = sbr.rel (0) target = $region9
    $region8: #{tpu_custom_call.1} parent=1 // pred_region
      %s39 = ssub.s32 256, 256
      %40 = vsyncadd [#allocation6], %s39
      %s41 = sshll.u32 [#allocation5], 4
      %s42 = int_to_ptr.vmem [resolvable:$true] %s41
      %47 = dma.hbm_to_vmem [thread:$0]  %s1, 256, %s42, [#allocation6], 128, 128, 8
    $region9: #{tpu_custom_call.1} parent=1 // pred_fallthru
      _
    // Predicated region
    $region10: #{tpu_custom_call.1} parent=1 // pred_check
      _
    $region11: #{tpu_custom_call.1} parent=1 // pred_check_branch
      %49 = sbr.rel (0) target = $region13
    $region12: #{tpu_custom_call.1} parent=1 // pred_region
      %s51 = ssub.s32 256, 256
      %52 = vsyncadd [#allocation6], %s51
      %s53 = sshll.u32 [#allocation7], 4
      %s54 = int_to_ptr.vmem [resolvable:$true] %s53
      %59 = dma.hbm_to_vmem [thread:$0]  %s2, 256, %s54, [#allocation6], 128, 128, 8
    $region13: #{tpu_custom_call.1} parent=1 // pred_fallthru
      _
    // Predicated region
    $region14: #{tpu_custom_call.1} parent=1 // pred_check
      _
    $region15: #{tpu_custom_call.1} parent=1 // pred_check_branch
      %61 = sbr.rel (0) target = $region17
    $region16: #{tpu_custom_call.1} parent=1 // pred_region
      %s63 = ssub.s32 256, 256
      %64 = vsyncadd [#allocation9], %s63
      %s65 = sshll.u32 [#allocation8], 4
      %s66 = int_to_ptr.vmem [resolvable:$true] %s65
      %71 = dma.hbm_to_vmem [thread:$0]  %s3, 256, %s66, [#allocation9], 128, 128, 8
    $region17: #{tpu_custom_call.1} parent=1 // pred_fallthru
      _
    // Predicated region
    $region18: #{tpu_custom_call.1} parent=1 // pred_check
      _
    $region19: #{tpu_custom_call.1} parent=1 // pred_check_branch
      %73 = sbr.rel (0) target = $region21
    $region20: #{tpu_custom_call.1} parent=1 // pred_region
      %s75 = ssub.s32 16384, 16384
      %76 = vsyncadd [#allocation9], %s75
      %s77 = sshll.u32 [#allocation10], 4
      %s78 = int_to_ptr.vmem [resolvable:$true] %s77
      %83 = dma.hbm_to_vmem [thread:$0]  %s4, 16384, %s78, [#allocation9], 512, 512, 32
    $region21: #{tpu_custom_call.1} parent=1 // pred_fallthru
      _
    // Predicated region
    $region22: #{tpu_custom_call.1} parent=1 // pred_check
      _
    $region23: #{tpu_custom_call.1} parent=1 // pred_check_branch
      %85 = sbr.rel (0) target = $region25
    $region24: #{tpu_custom_call.1} parent=1 // pred_region
      %s87 = ssub.s32 16384, 16384
      %88 = vsyncadd [#allocation12], %s87
      %s89 = sshll.u32 [#allocation11], 4
      %s90 = int_to_ptr.vmem [resolvable:$true] %s89
      %95 = dma.hbm_to_vmem [thread:$0]  %s5, 16384, %s90, [#allocation12], 512, 512, 32
    $region25: #{tpu_custom_call.1} parent=1 // pred_fallthru
      _
    // Predicated region
    $region26: #{tpu_custom_call.1} parent=1 // pred_check
      _
    $region27: #{tpu_custom_call.1} parent=1 // pred_check_branch
      %97 = sbr.rel (0) target = $region29
    $region28: #{tpu_custom_call.1} parent=1 // pred_region
      %s99 = ssub.s32 16384, 16384
      %100 = vsyncadd [#allocation12], %s99
      %s101 = sshll.u32 [#allocation13], 4
      %s102 = int_to_ptr.vmem [resolvable:$true] %s101
      %107 = dma.hbm_to_vmem [thread:$0]  %s6, 16384, %s102, [#allocation12], 512, 512, 32
    $region29: #{tpu_custom_call.1} parent=1 // pred_fallthru
      _
    // Predicated region
    $region30: #{tpu_custom_call.1} parent=1 // pred_check
      _
    $region31: #{tpu_custom_call.1} parent=1 // pred_check_branch
      %109 = sbr.rel (0) target = $region33
    $region32: #{tpu_custom_call.1} parent=1 // pred_region
      %s111 = ssub.s32 16384, 16384
      %112 = vsyncadd [#allocation15], %s111
      %s113 = sshll.u32 [#allocation14], 4
      %s114 = int_to_ptr.vmem [resolvable:$true] %s113
      %119 = dma.hbm_to_vmem [thread:$0]  %s7, 16384, %s114, [#allocation15], 512, 512, 32
    $region33: #{tpu_custom_call.1} parent=1 // pred_fallthru
      _
    // Predicated region
    $region34: #{tpu_custom_call.1} parent=1 // pred_check
      _
    $region35: #{tpu_custom_call.1} parent=1 // pred_check_branch
      %121 = sbr.rel (0) target = $region37
    $region36: #{tpu_custom_call.1} parent=1 // pred_region
      %s123 = ssub.s32 2048, 2048
      %124 = vsyncadd [#allocation15], %s123
      %s125 = sshll.u32 [#allocation16], 4
      %s126 = int_to_ptr.vmem [resolvable:$true] %s125
      %131 = dma.hbm_to_vmem [thread:$0]  %s8, 2048, %s126, [#allocation15], 128, 128, 8
    $region37: #{tpu_custom_call.1} parent=1 // pred_fallthru
      _
    // Predicated region
    $region38: #{tpu_custom_call.1} parent=1 // pred_check
      _
    $region39: #{tpu_custom_call.1} parent=1 // pred_check_branch
      %133 = sbr.rel (0) target = $region41
    $region40: #{tpu_custom_call.1} parent=1 // pred_region
      %s135 = ssub.s32 2304, 2304
      %136 = vsyncadd [#allocation18], %s135
      %s138 = sshll.u32 [#allocation17], 4
      %s139 = int_to_ptr.vmem [resolvable:$true] %s138
      %141 = dma.hbm_to_vmem [thread:$0]  %s9, 2304, %s139, [#allocation18]
    $region41: #{tpu_custom_call.1} parent=1 // pred_fallthru
      _
    // Predicated region
    $region42: #{tpu_custom_call.1} parent=1 // pred_check
      _
    $region43: #{tpu_custom_call.1} parent=1 // pred_check_branch
      %143 = sbr.rel (0) target = $region45
    $region44: #{tpu_custom_call.1} parent=1 // pred_region
      %144 = dma.done [#allocation3], 128
    $region45: #{tpu_custom_call.1} parent=1 // pred_fallthru
      _
    // Predicated region
    $region46: #{tpu_custom_call.1} parent=1 // pred_check
      _
    $region47: #{tpu_custom_call.1} parent=1 // pred_check_branch
      %146 = sbr.rel (0) target = $region49
    $region48: #{tpu_custom_call.1} parent=1 // pred_region
      %147 = dma.done [#allocation6], 256
    $region49: #{tpu_custom_call.1} parent=1 // pred_fallthru
      _
    // Predicated region
    $region50: #{tpu_custom_call.1} parent=1 // pred_check
      _
    $region51: #{tpu_custom_call.1} parent=1 // pred_check_branch
      %149 = sbr.rel (0) target = $region53
    $region52: #{tpu_custom_call.1} parent=1 // pred_region
      %150 = dma.done [#allocation6], 256
    $region53: #{tpu_custom_call.1} parent=1 // pred_fallthru
      _
    // Predicated region
    $region54: #{tpu_custom_call.1} parent=1 // pred_check
      _
    $region55: #{tpu_custom_call.1} parent=1 // pred_check_branch
      %152 = sbr.rel (0) target = $region57
    $region56: #{tpu_custom_call.1} parent=1 // pred_region
      %153 = dma.done [#allocation9], 256
    $region57: #{tpu_custom_call.1} parent=1 // pred_fallthru
      _
    // Predicated region
    $region58: #{tpu_custom_call.1} parent=1 // pred_check
      _
    $region59: #{tpu_custom_call.1} parent=1 // pred_check_branch
      %155 = sbr.rel (0) target = $region61
    $region60: #{tpu_custom_call.1} parent=1 // pred_region
      %156 = dma.done [#allocation9], 16384
    $region61: #{tpu_custom_call.1} parent=1 // pred_fallthru
      _
    // Predicated region
    $region62: #{tpu_custom_call.1} parent=1 // pred_check
      _
    $region63: #{tpu_custom_call.1} parent=1 // pred_check_branch
      %158 = sbr.rel (0) target = $region65
    $region64: #{tpu_custom_call.1} parent=1 // pred_region
      %159 = dma.done [#allocation12], 16384
    $region65: #{tpu_custom_call.1} parent=1 // pred_fallthru
      _
    // Predicated region
    $region66: #{tpu_custom_call.1} parent=1 // pred_check
      _
    $region67: #{tpu_custom_call.1} parent=1 // pred_check_branch
      %161 = sbr.rel (0) target = $region69
    $region68: #{tpu_custom_call.1} parent=1 // pred_region
      %162 = dma.done [#allocation12], 16384
    $region69: #{tpu_custom_call.1} parent=1 // pred_fallthru
      _
    // Predicated region
    $region70: #{tpu_custom_call.1} parent=1 // pred_check
      _
    $region71: #{tpu_custom_call.1} parent=1 // pred_check_branch
      %164 = sbr.rel (0) target = $region73
    $region72: #{tpu_custom_call.1} parent=1 // pred_region
      %165 = dma.done [#allocation15], 16384
    $region73: #{tpu_custom_call.1} parent=1 // pred_fallthru
      _
    // Predicated region
    $region74: #{tpu_custom_call.1} parent=1 // pred_check
      _
    $region75: #{tpu_custom_call.1} parent=1 // pred_check_branch
      %167 = sbr.rel (0) target = $region77
    $region76: #{tpu_custom_call.1} parent=1 // pred_region
      %168 = dma.done [#allocation15], 2048
    $region77: #{tpu_custom_call.1} parent=1 // pred_fallthru
      _
    // Predicated region
    $region78: #{tpu_custom_call.1} parent=1 // pred_check
      _
    $region79: #{tpu_custom_call.1} parent=1 // pred_check_branch
      %170 = sbr.rel (0) target = $region81
    $region80: #{tpu_custom_call.1} parent=1 // pred_region
      %171 = dma.done [#allocation18], 2304
    $region81: #{tpu_custom_call.1} parent=1 // pred_fallthru
      _
    %v172 = vld [vmem:[#allocation17] sm:$0xff]
    %v173 = vld [vmem:[#allocation17 + $0x8] sm:$0xff]
    %v174 = vld [vmem:[#allocation17 + $0x10] sm:$0xff]
    %v175 = vld [vmem:[#allocation17 + $0x18] sm:$0xff]
    %v176 = vld [vmem:[#allocation17 + $0x20] sm:$0xff]
    %v177 = vld [vmem:[#allocation17 + $0x28] sm:$0xff]
    %v178 = vld [vmem:[#allocation17 + $0x30] sm:$0xff]
    %v179 = vld [vmem:[#allocation17 + $0x38] sm:$0xff]
    %v180 = vld [vmem:[#allocation17 + $0x40] sm:$0xff]
    %v181 = vld [vmem:[#allocation17 + $0x48] sm:$0xff]
    %v182 = vld [vmem:[#allocation17 + $0x50] sm:$0xff]
    %v183 = vld [vmem:[#allocation17 + $0x58] sm:$0xff]
    %v184 = vld [vmem:[#allocation17 + $0x60] sm:$0xff]
    %v185 = vld [vmem:[#allocation17 + $0x68] sm:$0xff]
    %v186 = vld [vmem:[#allocation17 + $0x70] sm:$0xff]
    %v187 = vld [vmem:[#allocation17 + $0x78] sm:$0xff]
    %v188 = vld [vmem:[#allocation17 + $0x80] sm:$0xff]
    %v189 = vld [vmem:[#allocation17 + $0x88] sm:$0xff]
    %v190 = vld [vmem:[#allocation8] sm:$0xff]
    %v191 = vld [vmem:[#allocation8 + $0x8] sm:$0xff]
    %v192 = vld [vmem:[#allocation2] sm:$0xff]
    %vm193 = vcmask 130048
    %v195 = vsel %vm193, %v192, 0
    %197 = vmatprep.subr.mxu0 0.0
    %198 = vmatpush1.msra.mxu0 0.0
    %199 = vmatprep.subr.mxu0 0.0
    %200 = vmatpush1.msra.mxu0 0.0
    %201 = vmatprep.subr.mxu0 0.0
    %202 = vmatpush1.msra.mxu0 0.0
    %203 = vmatprep.subr.mxu0 0.0
    %204 = vmatpush1.msra.mxu0 0.0
    %205 = vmatprep.subr.mxu0 0.0
    %206 = vmatpush1.msra.mxu0 0.0
    %207 = vmatprep.subr.mxu0 0.0
    %208 = vmatpush1.msra.mxu0 0.0
    %209 = vmatprep.subr.mxu0 0.0
    %210 = vmatpush1.msra.mxu0 0.0
    %211 = vmatprep.subr.mxu0 0.0
    %212 = vmatpush1.msra.mxu0 0.0
    %213 = vmatprep.subr.mxu0 0.0
    %214 = vmatpush1.msra.mxu0 0.0
    %215 = vmatprep.subr.mxu0 0.0
    %216 = vmatpush1.msra.mxu0 0.0
    %217 = vmatprep.subr.mxu0 0.0
    %218 = vmatpush1.msra.mxu0 0.0
    %219 = vmatprep.subr.mxu0 0.0
    %220 = vmatpush1.msra.mxu0 0.0
    %221 = vmatprep.subr.mxu0 0.0
    %222 = vmatpush1.msra.mxu0 0.0
    %223 = vmatprep.subr.mxu0 0.0
    %224 = vmatpush1.msra.mxu0 0.0
    %225 = vmatprep.subr.mxu0 0.0
    %226 = vmatpush1.msra.mxu0 %v191
    %227 = vmatprep.subr.mxu0 0.0
    %228 = vmatpush1.msra.mxu0 %v190
    %229 = vmatprep.subr.mxu0 0.0
    %230 = vmatpush2.msra.mxu0 0.0
    %231 = vmatprep.subr.mxu0 0.0
    %232 = vmatpush2.msra.mxu0 0.0
    %233 = vmatprep.subr.mxu0 0.0
    %234 = vmatpush2.msra.mxu0 0.0
    %235 = vmatprep.subr.mxu0 0.0
    %236 = vmatpush2.msra.mxu0 0.0
    %237 = vmatprep.subr.mxu0 0.0
    %238 = vmatpush2.msra.mxu0 0.0
    %239 = vmatprep.subr.mxu0 0.0
    %240 = vmatpush2.msra.mxu0 0.0
    %241 = vmatprep.subr.mxu0 0.0
    %242 = vmatpush2.msra.mxu0 0.0
    %243 = vmatprep.subr.mxu0 0.0
    %244 = vmatpush2.msra.mxu0 0.0
    %245 = vmatprep.subr.mxu0 0.0
    %246 = vmatpush2.msra.mxu0 0.0
    %247 = vmatprep.subr.mxu0 0.0
    %248 = vmatpush2.msra.mxu0 0.0
    %249 = vmatprep.subr.mxu0 0.0
    %250 = vmatpush2.msra.mxu0 0.0
    %251 = vmatprep.subr.mxu0 0.0
    %252 = vmatpush2.msra.mxu0 0.0
    %253 = vmatprep.subr.mxu0 0.0
    %254 = vmatpush2.msra.mxu0 0.0
    %255 = vmatprep.subr.mxu0 0.0
    %256 = vmatpush2.msra.mxu0 0.0
    %257 = vmatprep.subr.mxu0 0.0
    %258 = vmatpush2.msra.mxu0 0.0
    %259 = vmatprep.subr.mxu0 0.0
    %260 = vmatpush2.msra.mxu0 0.0
    %261 = vmatprep.mubr.f32.mxu0 0.0
    %262 = vmatmul.mubr.f32.gmra.mxu0 %v195
    %v263 = vpop.f32.mrf.mxu0
    %v264 = vadd.f32 %v172, %v263
    %v265 = vpop.f32.mrf.mxu0
    %266 = vdwg.mxu0
    %v267 = vmax.f32 %v264, 0.0
    %v268 = vld [vmem:[#allocation5] sm:$0xff]
    %v269 = vld [vmem:[#allocation10] sm:$0xff]
    %v270 = vld [vmem:[#allocation10 + $0x8] sm:$0xff]
    %v271 = vld [vmem:[#allocation10 + $0x10] sm:$0xff]
    %v272 = vld [vmem:[#allocation10 + $0x18] sm:$0xff]
    %v273 = vld [vmem:[#allocation10 + $0x20] sm:$0xff]
    %v274 = vld [vmem:[#allocation10 + $0x28] sm:$0xff]
    %v275 = vld [vmem:[#allocation10 + $0x30] sm:$0xff]
    %v276 = vld [vmem:[#allocation10 + $0x38] sm:$0xff]
    %v277 = vld [vmem:[#allocation10 + $0x40] sm:$0xff]
    %v278 = vld [vmem:[#allocation10 + $0x48] sm:$0xff]
    %v279 = vld [vmem:[#allocation10 + $0x50] sm:$0xff]
    %v280 = vld [vmem:[#allocation10 + $0x58] sm:$0xff]
    %v281 = vld [vmem:[#allocation10 + $0x60] sm:$0xff]
    %v282 = vld [vmem:[#allocation10 + $0x68] sm:$0xff]
    %v283 = vld [vmem:[#allocation10 + $0x70] sm:$0xff]
    %v284 = vld [vmem:[#allocation10 + $0x78] sm:$0xff]
    %v285 = vld [vmem:[#allocation10 + $0x80] sm:$0xff]
    %v286 = vld [vmem:[#allocation10 + $0x88] sm:$0xff]
    %v287 = vld [vmem:[#allocation10 + $0x90] sm:$0xff]
    %v288 = vld [vmem:[#allocation10 + $0x98] sm:$0xff]
    %v289 = vld [vmem:[#allocation10 + $0xa0] sm:$0xff]
    %v290 = vld [vmem:[#allocation10 + $0xa8] sm:$0xff]
    %v291 = vld [vmem:[#allocation10 + $0xb0] sm:$0xff]
    %v292 = vld [vmem:[#allocation10 + $0xb8] sm:$0xff]
    %v293 = vld [vmem:[#allocation10 + $0xc0] sm:$0xff]
    %v294 = vld [vmem:[#allocation10 + $0xc8] sm:$0xff]
    %v295 = vld [vmem:[#allocation10 + $0xd0] sm:$0xff]
    %v296 = vld [vmem:[#allocation10 + $0xd8] sm:$0xff]
    %v297 = vld [vmem:[#allocation10 + $0xe0] sm:$0xff]
    %v298 = vld [vmem:[#allocation10 + $0xe8] sm:$0xff]
    %v299 = vld [vmem:[#allocation10 + $0xf0] sm:$0xff]
    %v300 = vld [vmem:[#allocation10 + $0xf8] sm:$0xff]
    %v301 = vld [vmem:[#allocation10 + $0x100] sm:$0xff]
    %v302 = vld [vmem:[#allocation10 + $0x108] sm:$0xff]
    %v303 = vld [vmem:[#allocation10 + $0x110] sm:$0xff]
    %v304 = vld [vmem:[#allocation10 + $0x118] sm:$0xff]
    %v305 = vld [vmem:[#allocation10 + $0x120] sm:$0xff]
    %v306 = vld [vmem:[#allocation10 + $0x128] sm:$0xff]
    %v307 = vld [vmem:[#allocation10 + $0x130] sm:$0xff]
    %v308 = vld [vmem:[#allocation10 + $0x138] sm:$0xff]
    %v309 = vld [vmem:[#allocation10 + $0x140] sm:$0xff]
    %v310 = vld [vmem:[#allocation10 + $0x148] sm:$0xff]
    %v311 = vld [vmem:[#allocation10 + $0x150] sm:$0xff]
    %v312 = vld [vmem:[#allocation10 + $0x158] sm:$0xff]
    %v313 = vld [vmem:[#allocation10 + $0x160] sm:$0xff]
    %v314 = vld [vmem:[#allocation10 + $0x168] sm:$0xff]
    %v315 = vld [vmem:[#allocation10 + $0x170] sm:$0xff]
    %v316 = vld [vmem:[#allocation10 + $0x178] sm:$0xff]
    %v317 = vld [vmem:[#allocation10 + $0x180] sm:$0xff]
    %v318 = vld [vmem:[#allocation10 + $0x188] sm:$0xff]
    %v319 = vld [vmem:[#allocation10 + $0x190] sm:$0xff]
    %v320 = vld [vmem:[#allocation10 + $0x198] sm:$0xff]
    %v321 = vld [vmem:[#allocation10 + $0x1a0] sm:$0xff]
    %v322 = vld [vmem:[#allocation10 + $0x1a8] sm:$0xff]
    %v323 = vld [vmem:[#allocation10 + $0x1b0] sm:$0xff]
    %v324 = vld [vmem:[#allocation10 + $0x1b8] sm:$0xff]
    %v325 = vld [vmem:[#allocation10 + $0x1c0] sm:$0xff]
    %v326 = vld [vmem:[#allocation10 + $0x1c8] sm:$0xff]
    %v327 = vld [vmem:[#allocation10 + $0x1d0] sm:$0xff]
    %v328 = vld [vmem:[#allocation10 + $0x1d8] sm:$0xff]
    %v329 = vld [vmem:[#allocation10 + $0x1e0] sm:$0xff]
    %v330 = vld [vmem:[#allocation10 + $0x1e8] sm:$0xff]
    %v331 = vld [vmem:[#allocation10 + $0x1f0] sm:$0xff]
    %v332 = vld [vmem:[#allocation10 + $0x1f8] sm:$0xff]
    %v333 = vld [vmem:[#allocation11] sm:$0xff]
    %v334 = vld [vmem:[#allocation11 + $0x8] sm:$0xff]
    %v335 = vld [vmem:[#allocation11 + $0x10] sm:$0xff]
    %v336 = vld [vmem:[#allocation11 + $0x18] sm:$0xff]
    %v337 = vld [vmem:[#allocation11 + $0x20] sm:$0xff]
    %v338 = vld [vmem:[#allocation11 + $0x28] sm:$0xff]
    %v339 = vld [vmem:[#allocation11 + $0x30] sm:$0xff]
    %v340 = vld [vmem:[#allocation11 + $0x38] sm:$0xff]
    %v341 = vld [vmem:[#allocation11 + $0x40] sm:$0xff]
    %v342 = vld [vmem:[#allocation11 + $0x48] sm:$0xff]
    %v343 = vld [vmem:[#allocation11 + $0x50] sm:$0xff]
    %v344 = vld [vmem:[#allocation11 + $0x58] sm:$0xff]
    %v345 = vld [vmem:[#allocation11 + $0x60] sm:$0xff]
    %v346 = vld [vmem:[#allocation11 + $0x68] sm:$0xff]
    %v347 = vld [vmem:[#allocation11 + $0x70] sm:$0xff]
    %v348 = vld [vmem:[#allocation11 + $0x78] sm:$0xff]
    %v349 = vld [vmem:[#allocation11 + $0x80] sm:$0xff]
    %v350 = vld [vmem:[#allocation11 + $0x88] sm:$0xff]
    %v351 = vld [vmem:[#allocation11 + $0x90] sm:$0xff]
    %v352 = vld [vmem:[#allocation11 + $0x98] sm:$0xff]
    %v353 = vld [vmem:[#allocation11 + $0xa0] sm:$0xff]
    %v354 = vld [vmem:[#allocation11 + $0xa8] sm:$0xff]
    %v355 = vld [vmem:[#allocation11 + $0xb0] sm:$0xff]
    %v356 = vld [vmem:[#allocation11 + $0xb8] sm:$0xff]
    %v357 = vld [vmem:[#allocation11 + $0xc0] sm:$0xff]
    %v358 = vld [vmem:[#allocation11 + $0xc8] sm:$0xff]
    %v359 = vld [vmem:[#allocation11 + $0xd0] sm:$0xff]
    %v360 = vld [vmem:[#allocation11 + $0xd8] sm:$0xff]
    %v361 = vld [vmem:[#allocation11 + $0xe0] sm:$0xff]
    %v362 = vld [vmem:[#allocation11 + $0xe8] sm:$0xff]
    %v363 = vld [vmem:[#allocation11 + $0xf0] sm:$0xff]
    %v364 = vld [vmem:[#allocation11 + $0xf8] sm:$0xff]
    %v365 = vld [vmem:[#allocation11 + $0x100] sm:$0xff]
    %v366 = vld [vmem:[#allocation11 + $0x108] sm:$0xff]
    %v367 = vld [vmem:[#allocation11 + $0x110] sm:$0xff]
    %v368 = vld [vmem:[#allocation11 + $0x118] sm:$0xff]
    %v369 = vld [vmem:[#allocation11 + $0x120] sm:$0xff]
    %v370 = vld [vmem:[#allocation11 + $0x128] sm:$0xff]
    %v371 = vld [vmem:[#allocation11 + $0x130] sm:$0xff]
    %v372 = vld [vmem:[#allocation11 + $0x138] sm:$0xff]
    %v373 = vld [vmem:[#allocation11 + $0x140] sm:$0xff]
    %v374 = vld [vmem:[#allocation11 + $0x148] sm:$0xff]
    %v375 = vld [vmem:[#allocation11 + $0x150] sm:$0xff]
    %v376 = vld [vmem:[#allocation11 + $0x158] sm:$0xff]
    %v377 = vld [vmem:[#allocation11 + $0x160] sm:$0xff]
    %v378 = vld [vmem:[#allocation11 + $0x168] sm:$0xff]
    %v379 = vld [vmem:[#allocation11 + $0x170] sm:$0xff]
    %v380 = vld [vmem:[#allocation11 + $0x178] sm:$0xff]
    %v381 = vld [vmem:[#allocation11 + $0x180] sm:$0xff]
    %v382 = vld [vmem:[#allocation11 + $0x188] sm:$0xff]
    %v383 = vld [vmem:[#allocation11 + $0x190] sm:$0xff]
    %v384 = vld [vmem:[#allocation11 + $0x198] sm:$0xff]
    %v385 = vld [vmem:[#allocation11 + $0x1a0] sm:$0xff]
    %v386 = vld [vmem:[#allocation11 + $0x1a8] sm:$0xff]
    %v387 = vld [vmem:[#allocation11 + $0x1b0] sm:$0xff]
    %v388 = vld [vmem:[#allocation11 + $0x1b8] sm:$0xff]
    %v389 = vld [vmem:[#allocation11 + $0x1c0] sm:$0xff]
    %v390 = vld [vmem:[#allocation11 + $0x1c8] sm:$0xff]
    %v391 = vld [vmem:[#allocation11 + $0x1d0] sm:$0xff]
    %v392 = vld [vmem:[#allocation11 + $0x1d8] sm:$0xff]
    %v393 = vld [vmem:[#allocation11 + $0x1e0] sm:$0xff]
    %v394 = vld [vmem:[#allocation11 + $0x1e8] sm:$0xff]
    %v395 = vld [vmem:[#allocation11 + $0x1f0] sm:$0xff]
    %v396 = vld [vmem:[#allocation11 + $0x1f8] sm:$0xff]
    %397 = vmatprep.subr.mxu0 %v394
    %398 = vmatpush1.msra.mxu0 %v393
    %399 = vmatprep.subr.mxu0 %v390
    %400 = vmatpush1.msra.mxu0 %v389
    %401 = vmatprep.subr.mxu0 %v386
    %402 = vmatpush1.msra.mxu0 %v385
    %403 = vmatprep.subr.mxu0 %v382
    %404 = vmatpush1.msra.mxu0 %v381
    %405 = vmatprep.subr.mxu0 %v378
    %406 = vmatpush1.msra.mxu0 %v377
    %407 = vmatprep.subr.mxu0 %v374
    %408 = vmatpush1.msra.mxu0 %v373
    %409 = vmatprep.subr.mxu0 %v370
    %410 = vmatpush1.msra.mxu0 %v369
    %411 = vmatprep.subr.mxu0 %v366
    %412 = vmatpush1.msra.mxu0 %v365
    %413 = vmatprep.subr.mxu0 %v362
    %414 = vmatpush1.msra.mxu0 %v361
    %415 = vmatprep.subr.mxu0 %v358
    %416 = vmatpush1.msra.mxu0 %v357
    %417 = vmatprep.subr.mxu0 %v354
    %418 = vmatpush1.msra.mxu0 %v353
    %419 = vmatprep.subr.mxu0 %v350
    %420 = vmatpush1.msra.mxu0 %v349
    %421 = vmatprep.subr.mxu0 %v346
    %422 = vmatpush1.msra.mxu0 %v345
    %423 = vmatprep.subr.mxu0 %v342
    %424 = vmatpush1.msra.mxu0 %v341
    %425 = vmatprep.subr.mxu0 %v338
    %426 = vmatpush1.msra.mxu0 %v337
    %427 = vmatprep.subr.mxu0 %v334
    %428 = vmatpush1.msra.mxu0 %v333
    %429 = vmatprep.subr.mxu0 0.0
    %430 = vmatpush2.msra.mxu0 0.0
    %431 = vmatprep.subr.mxu0 0.0
    %432 = vmatpush2.msra.mxu0 0.0
    %433 = vmatprep.subr.mxu0 0.0
    %434 = vmatpush2.msra.mxu0 0.0
    %435 = vmatprep.subr.mxu0 0.0
    %436 = vmatpush2.msra.mxu0 0.0
    %437 = vmatprep.subr.mxu0 0.0
    %438 = vmatpush2.msra.mxu0 0.0
    %439 = vmatprep.subr.mxu0 0.0
    %440 = vmatpush2.msra.mxu0 0.0
    %441 = vmatprep.subr.mxu0 0.0
    %442 = vmatpush2.msra.mxu0 0.0
    %443 = vmatprep.subr.mxu0 0.0
    %444 = vmatpush2.msra.mxu0 0.0
    %445 = vmatprep.subr.mxu0 0.0
    %446 = vmatpush2.msra.mxu0 0.0
    %447 = vmatprep.subr.mxu0 0.0
    %448 = vmatpush2.msra.mxu0 0.0
    %449 = vmatprep.subr.mxu0 0.0
    %450 = vmatpush2.msra.mxu0 0.0
    %451 = vmatprep.subr.mxu0 0.0
    %452 = vmatpush2.msra.mxu0 0.0
    %453 = vmatprep.subr.mxu0 0.0
    %454 = vmatpush2.msra.mxu0 0.0
    %455 = vmatprep.subr.mxu0 0.0
    %456 = vmatpush2.msra.mxu0 0.0
    %457 = vmatprep.subr.mxu0 0.0
    %458 = vmatpush2.msra.mxu0 0.0
    %459 = vmatprep.subr.mxu0 0.0
    %460 = vmatpush2.msra.mxu0 0.0
    %461 = vmatprep.mubr.f32.mxu0 0.0
    %462 = vmatmul.mubr.f32.gmra.mxu0 %v268
    %v463 = vpop.f32.mrf.mxu0
    %v464 = vadd.f32 0.0, %v463
    %v465 = vpop.f32.mrf.mxu0
    %v466 = vadd.f32 0.0, %v465
    %467 = vdwg.mxu0
    %468 = vmatprep.subr.mxu0 %v396
    %469 = vmatpush1.msra.mxu0 %v395
    %470 = vmatprep.subr.mxu0 %v392
    %471 = vmatpush1.msra.mxu0 %v391
    %472 = vmatprep.subr.mxu0 %v388
    %473 = vmatpush1.msra.mxu0 %v387
    %474 = vmatprep.subr.mxu0 %v384
    %475 = vmatpush1.msra.mxu0 %v383
    %476 = vmatprep.subr.mxu0 %v380
    %477 = vmatpush1.msra.mxu0 %v379
    %478 = vmatprep.subr.mxu0 %v376
    %479 = vmatpush1.msra.mxu0 %v375
    %480 = vmatprep.subr.mxu0 %v372
    %481 = vmatpush1.msra.mxu0 %v371
    %482 = vmatprep.subr.mxu0 %v368
    %483 = vmatpush1.msra.mxu0 %v367
    %484 = vmatprep.subr.mxu0 %v364
    %485 = vmatpush1.msra.mxu0 %v363
    %486 = vmatprep.subr.mxu0 %v360
    %487 = vmatpush1.msra.mxu0 %v359
    %488 = vmatprep.subr.mxu0 %v356
    %489 = vmatpush1.msra.mxu0 %v355
    %490 = vmatprep.subr.mxu0 %v352
    %491 = vmatpush1.msra.mxu0 %v351
    %492 = vmatprep.subr.mxu0 %v348
    %493 = vmatpush1.msra.mxu0 %v347
    %494 = vmatprep.subr.mxu0 %v344
    %495 = vmatpush1.msra.mxu0 %v343
    %496 = vmatprep.subr.mxu0 %v340
    %497 = vmatpush1.msra.mxu0 %v339
    %498 = vmatprep.subr.mxu0 %v336
    %499 = vmatpush1.msra.mxu0 %v335
    %500 = vmatprep.subr.mxu0 0.0
    %501 = vmatpush2.msra.mxu0 0.0
    %502 = vmatprep.subr.mxu0 0.0
    %503 = vmatpush2.msra.mxu0 0.0
    %504 = vmatprep.subr.mxu0 0.0
    %505 = vmatpush2.msra.mxu0 0.0
    %506 = vmatprep.subr.mxu0 0.0
    %507 = vmatpush2.msra.mxu0 0.0
    %508 = vmatprep.subr.mxu0 0.0
    %509 = vmatpush2.msra.mxu0 0.0
    %510 = vmatprep.subr.mxu0 0.0
    %511 = vmatpush2.msra.mxu0 0.0
    %512 = vmatprep.subr.mxu0 0.0
    %513 = vmatpush2.msra.mxu0 0.0
    %514 = vmatprep.subr.mxu0 0.0
    %515 = vmatpush2.msra.mxu0 0.0
    %516 = vmatprep.subr.mxu0 0.0
    %517 = vmatpush2.msra.mxu0 0.0
    %518 = vmatprep.subr.mxu0 0.0
    %519 = vmatpush2.msra.mxu0 0.0
    %520 = vmatprep.subr.mxu0 0.0
    %521 = vmatpush2.msra.mxu0 0.0
    %522 = vmatprep.subr.mxu0 0.0
    %523 = vmatpush2.msra.mxu0 0.0
    %524 = vmatprep.subr.mxu0 0.0
    %525 = vmatpush2.msra.mxu0 0.0
    %526 = vmatprep.subr.mxu0 0.0
    %527 = vmatpush2.msra.mxu0 0.0
    %528 = vmatprep.subr.mxu0 0.0
    %529 = vmatpush2.msra.mxu0 0.0
    %530 = vmatprep.subr.mxu0 0.0
    %531 = vmatpush2.msra.mxu0 0.0
    %532 = vmatprep.mubr.f32.mxu0 0.0
    %533 = vmatmul.mubr.f32.gmra.mxu0 %v268
    %v534 = vpop.f32.mrf.mxu0
    %v535 = vadd.f32 0.0, %v534
    %v536 = vpop.f32.mrf.mxu0
    %v537 = vadd.f32 0.0, %v536
    %538 = vdwg.mxu0
    %539 = vmatprep.subr.mxu0 %v330
    %540 = vmatpush1.msra.mxu0 %v329
    %541 = vmatprep.subr.mxu0 %v326
    %542 = vmatpush1.msra.mxu0 %v325
    %543 = vmatprep.subr.mxu0 %v322
    %544 = vmatpush1.msra.mxu0 %v321
    %545 = vmatprep.subr.mxu0 %v318
    %546 = vmatpush1.msra.mxu0 %v317
    %547 = vmatprep.subr.mxu0 %v314
    %548 = vmatpush1.msra.mxu0 %v313
    %549 = vmatprep.subr.mxu0 %v310
    %550 = vmatpush1.msra.mxu0 %v309
    %551 = vmatprep.subr.mxu0 %v306
    %552 = vmatpush1.msra.mxu0 %v305
    %553 = vmatprep.subr.mxu0 %v302
    %554 = vmatpush1.msra.mxu0 %v301
    %555 = vmatprep.subr.mxu0 %v298
    %556 = vmatpush1.msra.mxu0 %v297
    %557 = vmatprep.subr.mxu0 %v294
    %558 = vmatpush1.msra.mxu0 %v293
    %559 = vmatprep.subr.mxu0 %v290
    %560 = vmatpush1.msra.mxu0 %v289
    %561 = vmatprep.subr.mxu0 %v286
    %562 = vmatpush1.msra.mxu0 %v285
    %563 = vmatprep.subr.mxu0 %v282
    %564 = vmatpush1.msra.mxu0 %v281
    %565 = vmatprep.subr.mxu0 %v278
    %566 = vmatpush1.msra.mxu0 %v277
    %567 = vmatprep.subr.mxu0 %v274
    %568 = vmatpush1.msra.mxu0 %v273
    %569 = vmatprep.subr.mxu0 %v270
    %570 = vmatpush1.msra.mxu0 %v269
    %571 = vmatprep.subr.mxu0 0.0
    %572 = vmatpush2.msra.mxu0 0.0
    %573 = vmatprep.subr.mxu0 0.0
    %574 = vmatpush2.msra.mxu0 0.0
    %575 = vmatprep.subr.mxu0 0.0
    %576 = vmatpush2.msra.mxu0 0.0
    %577 = vmatprep.subr.mxu0 0.0
    %578 = vmatpush2.msra.mxu0 0.0
    %579 = vmatprep.subr.mxu0 0.0
    %580 = vmatpush2.msra.mxu0 0.0
    %581 = vmatprep.subr.mxu0 0.0
    %582 = vmatpush2.msra.mxu0 0.0
    %583 = vmatprep.subr.mxu0 0.0
    %584 = vmatpush2.msra.mxu0 0.0
    %585 = vmatprep.subr.mxu0 0.0
    %586 = vmatpush2.msra.mxu0 0.0
    %587 = vmatprep.subr.mxu0 0.0
    %588 = vmatpush2.msra.mxu0 0.0
    %589 = vmatprep.subr.mxu0 0.0
    %590 = vmatpush2.msra.mxu0 0.0
    %591 = vmatprep.subr.mxu0 0.0
    %592 = vmatpush2.msra.mxu0 0.0
    %593 = vmatprep.subr.mxu0 0.0
    %594 = vmatpush2.msra.mxu0 0.0
    %595 = vmatprep.subr.mxu0 0.0
    %596 = vmatpush2.msra.mxu0 0.0
    %597 = vmatprep.subr.mxu0 0.0
    %598 = vmatpush2.msra.mxu0 0.0
    %599 = vmatprep.subr.mxu0 0.0
    %600 = vmatpush2.msra.mxu0 0.0
    %601 = vmatprep.subr.mxu0 0.0
    %602 = vmatpush2.msra.mxu0 0.0
    %603 = vmatprep.mubr.f32.mxu0 0.0
    %604 = vmatmul.mubr.f32.gmra.mxu0 %v267
    %v605 = vpop.f32.mrf.mxu0
    %v606 = vadd.f32 %v464, %v605
    %v607 = vpop.f32.mrf.mxu0
    %v608 = vadd.f32 %v466, %v607
    %609 = vdwg.mxu0
    %610 = vmatprep.subr.mxu0 %v332
    %611 = vmatpush1.msra.mxu0 %v331
    %612 = vmatprep.subr.mxu0 %v328
    %613 = vmatpush1.msra.mxu0 %v327
    %614 = vmatprep.subr.mxu0 %v324
    %615 = vmatpush1.msra.mxu0 %v323
    %616 = vmatprep.subr.mxu0 %v320
    %617 = vmatpush1.msra.mxu0 %v319
    %618 = vmatprep.subr.mxu0 %v316
    %619 = vmatpush1.msra.mxu0 %v315
    %620 = vmatprep.subr.mxu0 %v312
    %621 = vmatpush1.msra.mxu0 %v311
    %622 = vmatprep.subr.mxu0 %v308
    %623 = vmatpush1.msra.mxu0 %v307
    %624 = vmatprep.subr.mxu0 %v304
    %625 = vmatpush1.msra.mxu0 %v303
    %626 = vmatprep.subr.mxu0 %v300
    %627 = vmatpush1.msra.mxu0 %v299
    %628 = vmatprep.subr.mxu0 %v296
    %629 = vmatpush1.msra.mxu0 %v295
    %630 = vmatprep.subr.mxu0 %v292
    %631 = vmatpush1.msra.mxu0 %v291
    %632 = vmatprep.subr.mxu0 %v288
    %633 = vmatpush1.msra.mxu0 %v287
    %634 = vmatprep.subr.mxu0 %v284
    %635 = vmatpush1.msra.mxu0 %v283
    %636 = vmatprep.subr.mxu0 %v280
    %637 = vmatpush1.msra.mxu0 %v279
    %638 = vmatprep.subr.mxu0 %v276
    %639 = vmatpush1.msra.mxu0 %v275
    %640 = vmatprep.subr.mxu0 %v272
    %641 = vmatpush1.msra.mxu0 %v271
    %642 = vmatprep.subr.mxu0 0.0
    %643 = vmatpush2.msra.mxu0 0.0
    %644 = vmatprep.subr.mxu0 0.0
    %645 = vmatpush2.msra.mxu0 0.0
    %646 = vmatprep.subr.mxu0 0.0
    %647 = vmatpush2.msra.mxu0 0.0
    %648 = vmatprep.subr.mxu0 0.0
    %649 = vmatpush2.msra.mxu0 0.0
    %650 = vmatprep.subr.mxu0 0.0
    %651 = vmatpush2.msra.mxu0 0.0
    %652 = vmatprep.subr.mxu0 0.0
    %653 = vmatpush2.msra.mxu0 0.0
    %654 = vmatprep.subr.mxu0 0.0
    %655 = vmatpush2.msra.mxu0 0.0
    %656 = vmatprep.subr.mxu0 0.0
    %657 = vmatpush2.msra.mxu0 0.0
    %658 = vmatprep.subr.mxu0 0.0
    %659 = vmatpush2.msra.mxu0 0.0
    %660 = vmatprep.subr.mxu0 0.0
    %661 = vmatpush2.msra.mxu0 0.0
    %662 = vmatprep.subr.mxu0 0.0
    %663 = vmatpush2.msra.mxu0 0.0
    %664 = vmatprep.subr.mxu0 0.0
    %665 = vmatpush2.msra.mxu0 0.0
    %666 = vmatprep.subr.mxu0 0.0
    %667 = vmatpush2.msra.mxu0 0.0
    %668 = vmatprep.subr.mxu0 0.0
    %669 = vmatpush2.msra.mxu0 0.0
    %670 = vmatprep.subr.mxu0 0.0
    %671 = vmatpush2.msra.mxu0 0.0
    %672 = vmatprep.subr.mxu0 0.0
    %673 = vmatpush2.msra.mxu0 0.0
    %674 = vmatprep.mubr.f32.mxu0 0.0
    %675 = vmatmul.mubr.f32.gmra.mxu0 %v267
    %v676 = vpop.f32.mrf.mxu0
    %v677 = vadd.f32 %v535, %v676
    %v678 = vpop.f32.mrf.mxu0
    %v679 = vadd.f32 %v537, %v678
    %680 = vdwg.mxu0
    %v681 = vadd.f32 %v606, %v173
    %v682 = vadd.f32 %v608, %v174
    %v683 = vadd.f32 %v677, %v175
    %v684 = vadd.f32 %v679, %v176
    %v685 = vmul.f32 %v681, 0.5
    %v686 = vmul.f32 %v682, 0.5
    %v687 = vtanh.pop %v685
    %v688 = vtanh.pop %v686
    %v689 = vmul.f32 %v687, 0.5
    %v690 = vmul.f32 %v688, 0.5
    %v691 = vadd.f32 %v689, 0.5
    %v692 = vadd.f32 %v690, 0.5
    %v693 = vmul.f32 %v691, %v684
    %v694 = vadd.f32 %v683, %v693
    %v695 = vtanh.pop %v694
    %v696 = vsub.f32 %v268, %v695
    %v697 = vmul.f32 %v692, %v696
    %v698 = vadd.f32 %v695, %v697
    %699 = vst [vmem:[#allocation20] sm:$0xff] %v698
    %s700 = scalar_lea.vmem [#allocation5], 8
    %v701 = vld [vmem:[%s700] sm:$0xff]
    %s702 = scalar_lea.vmem [#allocation10], 512
    %v703 = vld [vmem:[%s702] sm:$0xff]
    %v704 = vld [vmem:[%s702 + $0x8] sm:$0xff]
    %v705 = vld [vmem:[%s702 + $0x10] sm:$0xff]
    %v706 = vld [vmem:[%s702 + $0x18] sm:$0xff]
    %v707 = vld [vmem:[%s702 + $0x20] sm:$0xff]
    %v708 = vld [vmem:[%s702 + $0x28] sm:$0xff]
    %v709 = vld [vmem:[%s702 + $0x30] sm:$0xff]
    %v710 = vld [vmem:[%s702 + $0x38] sm:$0xff]
    %v711 = vld [vmem:[%s702 + $0x40] sm:$0xff]
    %v712 = vld [vmem:[%s702 + $0x48] sm:$0xff]
    %v713 = vld [vmem:[%s702 + $0x50] sm:$0xff]
    %v714 = vld [vmem:[%s702 + $0x58] sm:$0xff]
    %v715 = vld [vmem:[%s702 + $0x60] sm:$0xff]
    %v716 = vld [vmem:[%s702 + $0x68] sm:$0xff]
    %v717 = vld [vmem:[%s702 + $0x70] sm:$0xff]
    %v718 = vld [vmem:[%s702 + $0x78] sm:$0xff]
    %v719 = vld [vmem:[%s702 + $0x80] sm:$0xff]
    %v720 = vld [vmem:[%s702 + $0x88] sm:$0xff]
    %v721 = vld [vmem:[%s702 + $0x90] sm:$0xff]
    %v722 = vld [vmem:[%s702 + $0x98] sm:$0xff]
    %v723 = vld [vmem:[%s702 + $0xa0] sm:$0xff]
    %v724 = vld [vmem:[%s702 + $0xa8] sm:$0xff]
    %v725 = vld [vmem:[%s702 + $0xb0] sm:$0xff]
    %v726 = vld [vmem:[%s702 + $0xb8] sm:$0xff]
    %v727 = vld [vmem:[%s702 + $0xc0] sm:$0xff]
    %v728 = vld [vmem:[%s702 + $0xc8] sm:$0xff]
    %v729 = vld [vmem:[%s702 + $0xd0] sm:$0xff]
    %v730 = vld [vmem:[%s702 + $0xd8] sm:$0xff]
    %v731 = vld [vmem:[%s702 + $0xe0] sm:$0xff]
    %v732 = vld [vmem:[%s702 + $0xe8] sm:$0xff]
    %v733 = vld [vmem:[%s702 + $0xf0] sm:$0xff]
    %v734 = vld [vmem:[%s702 + $0xf8] sm:$0xff]
    %v735 = vld [vmem:[%s702 + $0x100] sm:$0xff]
    %v736 = vld [vmem:[%s702 + $0x108] sm:$0xff]
    %v737 = vld [vmem:[%s702 + $0x110] sm:$0xff]
    %v738 = vld [vmem:[%s702 + $0x118] sm:$0xff]
    %v739 = vld [vmem:[%s702 + $0x120] sm:$0xff]
    %v740 = vld [vmem:[%s702 + $0x128] sm:$0xff]
    %v741 = vld [vmem:[%s702 + $0x130] sm:$0xff]
    %v742 = vld [vmem:[%s702 + $0x138] sm:$0xff]
    %v743 = vld [vmem:[%s702 + $0x140] sm:$0xff]
    %v744 = vld [vmem:[%s702 + $0x148] sm:$0xff]
    %v745 = vld [vmem:[%s702 + $0x150] sm:$0xff]
    %v746 = vld [vmem:[%s702 + $0x158] sm:$0xff]
    %v747 = vld [vmem:[%s702 + $0x160] sm:$0xff]
    %v748 = vld [vmem:[%s702 + $0x168] sm:$0xff]
    %v749 = vld [vmem:[%s702 + $0x170] sm:$0xff]
    %v750 = vld [vmem:[%s702 + $0x178] sm:$0xff]
    %v751 = vld [vmem:[%s702 + $0x180] sm:$0xff]
    %v752 = vld [vmem:[%s702 + $0x188] sm:$0xff]
    %v753 = vld [vmem:[%s702 + $0x190] sm:$0xff]
    %v754 = vld [vmem:[%s702 + $0x198] sm:$0xff]
    %v755 = vld [vmem:[%s702 + $0x1a0] sm:$0xff]
    %v756 = vld [vmem:[%s702 + $0x1a8] sm:$0xff]
    %v757 = vld [vmem:[%s702 + $0x1b0] sm:$0xff]
    %v758 = vld [vmem:[%s702 + $0x1b8] sm:$0xff]
    %v759 = vld [vmem:[%s702 + $0x1c0] sm:$0xff]
    %v760 = vld [vmem:[%s702 + $0x1c8] sm:$0xff]
    %v761 = vld [vmem:[%s702 + $0x1d0] sm:$0xff]
    %v762 = vld [vmem:[%s702 + $0x1d8] sm:$0xff]
    %v763 = vld [vmem:[%s702 + $0x1e0] sm:$0xff]
    %v764 = vld [vmem:[%s702 + $0x1e8] sm:$0xff]
    %v765 = vld [vmem:[%s702 + $0x1f0] sm:$0xff]
    %v766 = vld [vmem:[%s702 + $0x1f8] sm:$0xff]
    %s767 = scalar_lea.vmem [#allocation11], 512
    %v768 = vld [vmem:[%s767] sm:$0xff]
    %v769 = vld [vmem:[%s767 + $0x8] sm:$0xff]
    %v770 = vld [vmem:[%s767 + $0x10] sm:$0xff]
    %v771 = vld [vmem:[%s767 + $0x18] sm:$0xff]
    %v772 = vld [vmem:[%s767 + $0x20] sm:$0xff]
    %v773 = vld [vmem:[%s767 + $0x28] sm:$0xff]
    %v774 = vld [vmem:[%s767 + $0x30] sm:$0xff]
    %v775 = vld [vmem:[%s767 + $0x38] sm:$0xff]
    %v776 = vld [vmem:[%s767 + $0x40] sm:$0xff]
    %v777 = vld [vmem:[%s767 + $0x48] sm:$0xff]
    %v778 = vld [vmem:[%s767 + $0x50] sm:$0xff]
    %v779 = vld [vmem:[%s767 + $0x58] sm:$0xff]
    %v780 = vld [vmem:[%s767 + $0x60] sm:$0xff]
    %v781 = vld [vmem:[%s767 + $0x68] sm:$0xff]
    %v782 = vld [vmem:[%s767 + $0x70] sm:$0xff]
    %v783 = vld [vmem:[%s767 + $0x78] sm:$0xff]
    %v784 = vld [vmem:[%s767 + $0x80] sm:$0xff]
    %v785 = vld [vmem:[%s767 + $0x88] sm:$0xff]
    %v786 = vld [vmem:[%s767 + $0x90] sm:$0xff]
    %v787 = vld [vmem:[%s767 + $0x98] sm:$0xff]
    %v788 = vld [vmem:[%s767 + $0xa0] sm:$0xff]
    %v789 = vld [vmem:[%s767 + $0xa8] sm:$0xff]
    %v790 = vld [vmem:[%s767 + $0xb0] sm:$0xff]
    %v791 = vld [vmem:[%s767 + $0xb8] sm:$0xff]
    %v792 = vld [vmem:[%s767 + $0xc0] sm:$0xff]
    %v793 = vld [vmem:[%s767 + $0xc8] sm:$0xff]
    %v794 = vld [vmem:[%s767 + $0xd0] sm:$0xff]
    %v795 = vld [vmem:[%s767 + $0xd8] sm:$0xff]
    %v796 = vld [vmem:[%s767 + $0xe0] sm:$0xff]
    %v797 = vld [vmem:[%s767 + $0xe8] sm:$0xff]
    %v798 = vld [vmem:[%s767 + $0xf0] sm:$0xff]
    %v799 = vld [vmem:[%s767 + $0xf8] sm:$0xff]
    %v800 = vld [vmem:[%s767 + $0x100] sm:$0xff]
    %v801 = vld [vmem:[%s767 + $0x108] sm:$0xff]
    %v802 = vld [vmem:[%s767 + $0x110] sm:$0xff]
    %v803 = vld [vmem:[%s767 + $0x118] sm:$0xff]
    %v804 = vld [vmem:[%s767 + $0x120] sm:$0xff]
    %v805 = vld [vmem:[%s767 + $0x128] sm:$0xff]
    %v806 = vld [vmem:[%s767 + $0x130] sm:$0xff]
    %v807 = vld [vmem:[%s767 + $0x138] sm:$0xff]
    %v808 = vld [vmem:[%s767 + $0x140] sm:$0xff]
    %v809 = vld [vmem:[%s767 + $0x148] sm:$0xff]
    %v810 = vld [vmem:[%s767 + $0x150] sm:$0xff]
    %v811 = vld [vmem:[%s767 + $0x158] sm:$0xff]
    %v812 = vld [vmem:[%s767 + $0x160] sm:$0xff]
    %v813 = vld [vmem:[%s767 + $0x168] sm:$0xff]
    %v814 = vld [vmem:[%s767 + $0x170] sm:$0xff]
    %v815 = vld [vmem:[%s767 + $0x178] sm:$0xff]
    %v816 = vld [vmem:[%s767 + $0x180] sm:$0xff]
    %v817 = vld [vmem:[%s767 + $0x188] sm:$0xff]
    %v818 = vld [vmem:[%s767 + $0x190] sm:$0xff]
    %v819 = vld [vmem:[%s767 + $0x198] sm:$0xff]
    %v820 = vld [vmem:[%s767 + $0x1a0] sm:$0xff]
    %v821 = vld [vmem:[%s767 + $0x1a8] sm:$0xff]
    %v822 = vld [vmem:[%s767 + $0x1b0] sm:$0xff]
    %v823 = vld [vmem:[%s767 + $0x1b8] sm:$0xff]
    %v824 = vld [vmem:[%s767 + $0x1c0] sm:$0xff]
    %v825 = vld [vmem:[%s767 + $0x1c8] sm:$0xff]
    %v826 = vld [vmem:[%s767 + $0x1d0] sm:$0xff]
    %v827 = vld [vmem:[%s767 + $0x1d8] sm:$0xff]
    %v828 = vld [vmem:[%s767 + $0x1e0] sm:$0xff]
    %v829 = vld [vmem:[%s767 + $0x1e8] sm:$0xff]
    %v830 = vld [vmem:[%s767 + $0x1f0] sm:$0xff]
    %v831 = vld [vmem:[%s767 + $0x1f8] sm:$0xff]
    %832 = vmatprep.subr.mxu0 %v829
    %833 = vmatpush1.msra.mxu0 %v828
    %834 = vmatprep.subr.mxu0 %v825
    %835 = vmatpush1.msra.mxu0 %v824
    %836 = vmatprep.subr.mxu0 %v821
    %837 = vmatpush1.msra.mxu0 %v820
    %838 = vmatprep.subr.mxu0 %v817
    %839 = vmatpush1.msra.mxu0 %v816
    %840 = vmatprep.subr.mxu0 %v813
    %841 = vmatpush1.msra.mxu0 %v812
    %842 = vmatprep.subr.mxu0 %v809
    %843 = vmatpush1.msra.mxu0 %v808
    %844 = vmatprep.subr.mxu0 %v805
    %845 = vmatpush1.msra.mxu0 %v804
    %846 = vmatprep.subr.mxu0 %v801
    %847 = vmatpush1.msra.mxu0 %v800
    %848 = vmatprep.subr.mxu0 %v797
    %849 = vmatpush1.msra.mxu0 %v796
    %850 = vmatprep.subr.mxu0 %v793
    %851 = vmatpush1.msra.mxu0 %v792
    %852 = vmatprep.subr.mxu0 %v789
    %853 = vmatpush1.msra.mxu0 %v788
    %854 = vmatprep.subr.mxu0 %v785
    %855 = vmatpush1.msra.mxu0 %v784
    %856 = vmatprep.subr.mxu0 %v781
    %857 = vmatpush1.msra.mxu0 %v780
    %858 = vmatprep.subr.mxu0 %v777
    %859 = vmatpush1.msra.mxu0 %v776
    %860 = vmatprep.subr.mxu0 %v773
    %861 = vmatpush1.msra.mxu0 %v772
    %862 = vmatprep.subr.mxu0 %v769
    %863 = vmatpush1.msra.mxu0 %v768
    %864 = vmatprep.subr.mxu0 0.0
    %865 = vmatpush2.msra.mxu0 0.0
    %866 = vmatprep.subr.mxu0 0.0
    %867 = vmatpush2.msra.mxu0 0.0
    %868 = vmatprep.subr.mxu0 0.0
    %869 = vmatpush2.msra.mxu0 0.0
    %870 = vmatprep.subr.mxu0 0.0
    %871 = vmatpush2.msra.mxu0 0.0
    %872 = vmatprep.subr.mxu0 0.0
    %873 = vmatpush2.msra.mxu0 0.0
    %874 = vmatprep.subr.mxu0 0.0
    %875 = vmatpush2.msra.mxu0 0.0
    %876 = vmatprep.subr.mxu0 0.0
    %877 = vmatpush2.msra.mxu0 0.0
    %878 = vmatprep.subr.mxu0 0.0
    %879 = vmatpush2.msra.mxu0 0.0
    %880 = vmatprep.subr.mxu0 0.0
    %881 = vmatpush2.msra.mxu0 0.0
    %882 = vmatprep.subr.mxu0 0.0
    %883 = vmatpush2.msra.mxu0 0.0
    %884 = vmatprep.subr.mxu0 0.0
    %885 = vmatpush2.msra.mxu0 0.0
    %886 = vmatprep.subr.mxu0 0.0
    %887 = vmatpush2.msra.mxu0 0.0
    %888 = vmatprep.subr.mxu0 0.0
    %889 = vmatpush2.msra.mxu0 0.0
    %890 = vmatprep.subr.mxu0 0.0
    %891 = vmatpush2.msra.mxu0 0.0
    %892 = vmatprep.subr.mxu0 0.0
    %893 = vmatpush2.msra.mxu0 0.0
    %894 = vmatprep.subr.mxu0 0.0
    %895 = vmatpush2.msra.mxu0 0.0
    %896 = vmatprep.mubr.f32.mxu0 0.0
    %897 = vmatmul.mubr.f32.gmra.mxu0 %v701
    %v898 = vpop.f32.mrf.mxu0
    %v899 = vadd.f32 0.0, %v898
    %v900 = vpop.f32.mrf.mxu0
    %v901 = vadd.f32 0.0, %v900
    %902 = vdwg.mxu0
    %903 = vmatprep.subr.mxu0 %v831
    %904 = vmatpush1.msra.mxu0 %v830
    %905 = vmatprep.subr.mxu0 %v827
    %906 = vmatpush1.msra.mxu0 %v826
    %907 = vmatprep.subr.mxu0 %v823
    %908 = vmatpush1.msra.mxu0 %v822
    %909 = vmatprep.subr.mxu0 %v819
    %910 = vmatpush1.msra.mxu0 %v818
    %911 = vmatprep.subr.mxu0 %v815
    %912 = vmatpush1.msra.mxu0 %v814
    %913 = vmatprep.subr.mxu0 %v811
    %914 = vmatpush1.msra.mxu0 %v810
    %915 = vmatprep.subr.mxu0 %v807
    %916 = vmatpush1.msra.mxu0 %v806
    %917 = vmatprep.subr.mxu0 %v803
    %918 = vmatpush1.msra.mxu0 %v802
    %919 = vmatprep.subr.mxu0 %v799
    %920 = vmatpush1.msra.mxu0 %v798
    %921 = vmatprep.subr.mxu0 %v795
    %922 = vmatpush1.msra.mxu0 %v794
    %923 = vmatprep.subr.mxu0 %v791
    %924 = vmatpush1.msra.mxu0 %v790
    %925 = vmatprep.subr.mxu0 %v787
    %926 = vmatpush1.msra.mxu0 %v786
    %927 = vmatprep.subr.mxu0 %v783
    %928 = vmatpush1.msra.mxu0 %v782
    %929 = vmatprep.subr.mxu0 %v779
    %930 = vmatpush1.msra.mxu0 %v778
    %931 = vmatprep.subr.mxu0 %v775
    %932 = vmatpush1.msra.mxu0 %v774
    %933 = vmatprep.subr.mxu0 %v771
    %934 = vmatpush1.msra.mxu0 %v770
    %935 = vmatprep.subr.mxu0 0.0
    %936 = vmatpush2.msra.mxu0 0.0
    %937 = vmatprep.subr.mxu0 0.0
    %938 = vmatpush2.msra.mxu0 0.0
    %939 = vmatprep.subr.mxu0 0.0
    %940 = vmatpush2.msra.mxu0 0.0
    %941 = vmatprep.subr.mxu0 0.0
    %942 = vmatpush2.msra.mxu0 0.0
    %943 = vmatprep.subr.mxu0 0.0
    %944 = vmatpush2.msra.mxu0 0.0
    %945 = vmatprep.subr.mxu0 0.0
    %946 = vmatpush2.msra.mxu0 0.0
    %947 = vmatprep.subr.mxu0 0.0
    %948 = vmatpush2.msra.mxu0 0.0
    %949 = vmatprep.subr.mxu0 0.0
    %950 = vmatpush2.msra.mxu0 0.0
    %951 = vmatprep.subr.mxu0 0.0
    %952 = vmatpush2.msra.mxu0 0.0
    %953 = vmatprep.subr.mxu0 0.0
    %954 = vmatpush2.msra.mxu0 0.0
    %955 = vmatprep.subr.mxu0 0.0
    %956 = vmatpush2.msra.mxu0 0.0
    %957 = vmatprep.subr.mxu0 0.0
    %958 = vmatpush2.msra.mxu0 0.0
    %959 = vmatprep.subr.mxu0 0.0
    %960 = vmatpush2.msra.mxu0 0.0
    %961 = vmatprep.subr.mxu0 0.0
    %962 = vmatpush2.msra.mxu0 0.0
    %963 = vmatprep.subr.mxu0 0.0
    %964 = vmatpush2.msra.mxu0 0.0
    %965 = vmatprep.subr.mxu0 0.0
    %966 = vmatpush2.msra.mxu0 0.0
    %967 = vmatprep.mubr.f32.mxu0 0.0
    %968 = vmatmul.mubr.f32.gmra.mxu0 %v701
    %v969 = vpop.f32.mrf.mxu0
    %v970 = vadd.f32 0.0, %v969
    %v971 = vpop.f32.mrf.mxu0
    %v972 = vadd.f32 0.0, %v971
    %973 = vdwg.mxu0
    %974 = vmatprep.subr.mxu0 %v764
    %975 = vmatpush1.msra.mxu0 %v763
    %976 = vmatprep.subr.mxu0 %v760
    %977 = vmatpush1.msra.mxu0 %v759
    %978 = vmatprep.subr.mxu0 %v756
    %979 = vmatpush1.msra.mxu0 %v755
    %980 = vmatprep.subr.mxu0 %v752
    %981 = vmatpush1.msra.mxu0 %v751
    %982 = vmatprep.subr.mxu0 %v748
    %983 = vmatpush1.msra.mxu0 %v747
    %984 = vmatprep.subr.mxu0 %v744
    %985 = vmatpush1.msra.mxu0 %v743
    %986 = vmatprep.subr.mxu0 %v740
    %987 = vmatpush1.msra.mxu0 %v739
    %988 = vmatprep.subr.mxu0 %v736
    %989 = vmatpush1.msra.mxu0 %v735
    %990 = vmatprep.subr.mxu0 %v732
    %991 = vmatpush1.msra.mxu0 %v731
    %992 = vmatprep.subr.mxu0 %v728
    %993 = vmatpush1.msra.mxu0 %v727
    %994 = vmatprep.subr.mxu0 %v724
    %995 = vmatpush1.msra.mxu0 %v723
    %996 = vmatprep.subr.mxu0 %v720
    %997 = vmatpush1.msra.mxu0 %v719
    %998 = vmatprep.subr.mxu0 %v716
    %999 = vmatpush1.msra.mxu0 %v715
    %1000 = vmatprep.subr.mxu0 %v712
    %1001 = vmatpush1.msra.mxu0 %v711
    %1002 = vmatprep.subr.mxu0 %v708
    %1003 = vmatpush1.msra.mxu0 %v707
    %1004 = vmatprep.subr.mxu0 %v704
    %1005 = vmatpush1.msra.mxu0 %v703
    %1006 = vmatprep.subr.mxu0 0.0
    %1007 = vmatpush2.msra.mxu0 0.0
    %1008 = vmatprep.subr.mxu0 0.0
    %1009 = vmatpush2.msra.mxu0 0.0
    %1010 = vmatprep.subr.mxu0 0.0
    %1011 = vmatpush2.msra.mxu0 0.0
    %1012 = vmatprep.subr.mxu0 0.0
    %1013 = vmatpush2.msra.mxu0 0.0
    %1014 = vmatprep.subr.mxu0 0.0
    %1015 = vmatpush2.msra.mxu0 0.0
    %1016 = vmatprep.subr.mxu0 0.0
    %1017 = vmatpush2.msra.mxu0 0.0
    %1018 = vmatprep.subr.mxu0 0.0
    %1019 = vmatpush2.msra.mxu0 0.0
    %1020 = vmatprep.subr.mxu0 0.0
    %1021 = vmatpush2.msra.mxu0 0.0
    %1022 = vmatprep.subr.mxu0 0.0
    %1023 = vmatpush2.msra.mxu0 0.0
    %1024 = vmatprep.subr.mxu0 0.0
    %1025 = vmatpush2.msra.mxu0 0.0
    %1026 = vmatprep.subr.mxu0 0.0
    %1027 = vmatpush2.msra.mxu0 0.0
    %1028 = vmatprep.subr.mxu0 0.0
    %1029 = vmatpush2.msra.mxu0 0.0
    %1030 = vmatprep.subr.mxu0 0.0
    %1031 = vmatpush2.msra.mxu0 0.0
    %1032 = vmatprep.subr.mxu0 0.0
    %1033 = vmatpush2.msra.mxu0 0.0
    %1034 = vmatprep.subr.mxu0 0.0
    %1035 = vmatpush2.msra.mxu0 0.0
    %1036 = vmatprep.subr.mxu0 0.0
    %1037 = vmatpush2.msra.mxu0 0.0
    %1038 = vmatprep.mubr.f32.mxu0 0.0
    %1039 = vmatmul.mubr.f32.gmra.mxu0 %v698
    %v1040 = vpop.f32.mrf.mxu0
    %v1041 = vadd.f32 %v899, %v1040
    %v1042 = vpop.f32.mrf.mxu0
    %v1043 = vadd.f32 %v901, %v1042
    %1044 = vdwg.mxu0
    %1045 = vmatprep.subr.mxu0 %v766
    %1046 = vmatpush1.msra.mxu0 %v765
    %1047 = vmatprep.subr.mxu0 %v762
    %1048 = vmatpush1.msra.mxu0 %v761
    %1049 = vmatprep.subr.mxu0 %v758
    %1050 = vmatpush1.msra.mxu0 %v757
    %1051 = vmatprep.subr.mxu0 %v754
    %1052 = vmatpush1.msra.mxu0 %v753
    %1053 = vmatprep.subr.mxu0 %v750
    %1054 = vmatpush1.msra.mxu0 %v749
    %1055 = vmatprep.subr.mxu0 %v746
    %1056 = vmatpush1.msra.mxu0 %v745
    %1057 = vmatprep.subr.mxu0 %v742
    %1058 = vmatpush1.msra.mxu0 %v741
    %1059 = vmatprep.subr.mxu0 %v738
    %1060 = vmatpush1.msra.mxu0 %v737
    %1061 = vmatprep.subr.mxu0 %v734
    %1062 = vmatpush1.msra.mxu0 %v733
    %1063 = vmatprep.subr.mxu0 %v730
    %1064 = vmatpush1.msra.mxu0 %v729
    %1065 = vmatprep.subr.mxu0 %v726
    %1066 = vmatpush1.msra.mxu0 %v725
    %1067 = vmatprep.subr.mxu0 %v722
    %1068 = vmatpush1.msra.mxu0 %v721
    %1069 = vmatprep.subr.mxu0 %v718
    %1070 = vmatpush1.msra.mxu0 %v717
    %1071 = vmatprep.subr.mxu0 %v714
    %1072 = vmatpush1.msra.mxu0 %v713
    %1073 = vmatprep.subr.mxu0 %v710
    %1074 = vmatpush1.msra.mxu0 %v709
    %1075 = vmatprep.subr.mxu0 %v706
    %1076 = vmatpush1.msra.mxu0 %v705
    %1077 = vmatprep.subr.mxu0 0.0
    %1078 = vmatpush2.msra.mxu0 0.0
    %1079 = vmatprep.subr.mxu0 0.0
    %1080 = vmatpush2.msra.mxu0 0.0
    %1081 = vmatprep.subr.mxu0 0.0
    %1082 = vmatpush2.msra.mxu0 0.0
    %1083 = vmatprep.subr.mxu0 0.0
    %1084 = vmatpush2.msra.mxu0 0.0
    %1085 = vmatprep.subr.mxu0 0.0
    %1086 = vmatpush2.msra.mxu0 0.0
    %1087 = vmatprep.subr.mxu0 0.0
    %1088 = vmatpush2.msra.mxu0 0.0
    %1089 = vmatprep.subr.mxu0 0.0
    %1090 = vmatpush2.msra.mxu0 0.0
    %1091 = vmatprep.subr.mxu0 0.0
    %1092 = vmatpush2.msra.mxu0 0.0
    %1093 = vmatprep.subr.mxu0 0.0
    %1094 = vmatpush2.msra.mxu0 0.0
    %1095 = vmatprep.subr.mxu0 0.0
    %1096 = vmatpush2.msra.mxu0 0.0
    %1097 = vmatprep.subr.mxu0 0.0
    %1098 = vmatpush2.msra.mxu0 0.0
    %1099 = vmatprep.subr.mxu0 0.0
    %1100 = vmatpush2.msra.mxu0 0.0
    %1101 = vmatprep.subr.mxu0 0.0
    %1102 = vmatpush2.msra.mxu0 0.0
    %1103 = vmatprep.subr.mxu0 0.0
    %1104 = vmatpush2.msra.mxu0 0.0
    %1105 = vmatprep.subr.mxu0 0.0
    %1106 = vmatpush2.msra.mxu0 0.0
    %1107 = vmatprep.subr.mxu0 0.0
    %1108 = vmatpush2.msra.mxu0 0.0
    %1109 = vmatprep.mubr.f32.mxu0 0.0
    %1110 = vmatmul.mubr.f32.gmra.mxu0 %v698
    %v1111 = vpop.f32.mrf.mxu0
    %v1112 = vadd.f32 %v970, %v1111
    %v1113 = vpop.f32.mrf.mxu0
    %v1114 = vadd.f32 %v972, %v1113
    %1115 = vdwg.mxu0
    %v1116 = vadd.f32 %v1041, %v177
    %v1117 = vadd.f32 %v1043, %v178
    %v1118 = vadd.f32 %v1112, %v179
    %v1119 = vadd.f32 %v1114, %v180
    %v1120 = vmul.f32 %v1116, 0.5
    %v1121 = vmul.f32 %v1117, 0.5
    %v1122 = vtanh.pop %v1120
    %v1123 = vtanh.pop %v1121
    %v1124 = vmul.f32 %v1122, 0.5
    %v1125 = vmul.f32 %v1123, 0.5
    %v1126 = vadd.f32 %v1124, 0.5
    %v1127 = vadd.f32 %v1125, 0.5
    %v1128 = vmul.f32 %v1126, %v1119
    %v1129 = vadd.f32 %v1118, %v1128
    %v1130 = vtanh.pop %v1129
    %v1131 = vsub.f32 %v701, %v1130
    %v1132 = vmul.f32 %v1127, %v1131
    %v1133 = vadd.f32 %v1130, %v1132
    %s1134 = scalar_lea.vmem [#allocation20], 8
    %1135 = vst [vmem:[%s1134] sm:$0xff] %v1133
    %v1136 = vld [vmem:[#allocation7] sm:$0xff]
    %v1137 = vld [vmem:[#allocation13] sm:$0xff]
    %v1138 = vld [vmem:[#allocation13 + $0x8] sm:$0xff]
    %v1139 = vld [vmem:[#allocation13 + $0x10] sm:$0xff]
    %v1140 = vld [vmem:[#allocation13 + $0x18] sm:$0xff]
    %v1141 = vld [vmem:[#allocation13 + $0x20] sm:$0xff]
    %v1142 = vld [vmem:[#allocation13 + $0x28] sm:$0xff]
    %v1143 = vld [vmem:[#allocation13 + $0x30] sm:$0xff]
    %v1144 = vld [vmem:[#allocation13 + $0x38] sm:$0xff]
    %v1145 = vld [vmem:[#allocation13 + $0x40] sm:$0xff]
    %v1146 = vld [vmem:[#allocation13 + $0x48] sm:$0xff]
    %v1147 = vld [vmem:[#allocation13 + $0x50] sm:$0xff]
    %v1148 = vld [vmem:[#allocation13 + $0x58] sm:$0xff]
    %v1149 = vld [vmem:[#allocation13 + $0x60] sm:$0xff]
    %v1150 = vld [vmem:[#allocation13 + $0x68] sm:$0xff]
    %v1151 = vld [vmem:[#allocation13 + $0x70] sm:$0xff]
    %v1152 = vld [vmem:[#allocation13 + $0x78] sm:$0xff]
    %v1153 = vld [vmem:[#allocation13 + $0x80] sm:$0xff]
    %v1154 = vld [vmem:[#allocation13 + $0x88] sm:$0xff]
    %v1155 = vld [vmem:[#allocation13 + $0x90] sm:$0xff]
    %v1156 = vld [vmem:[#allocation13 + $0x98] sm:$0xff]
    %v1157 = vld [vmem:[#allocation13 + $0xa0] sm:$0xff]
    %v1158 = vld [vmem:[#allocation13 + $0xa8] sm:$0xff]
    %v1159 = vld [vmem:[#allocation13 + $0xb0] sm:$0xff]
    %v1160 = vld [vmem:[#allocation13 + $0xb8] sm:$0xff]
    %v1161 = vld [vmem:[#allocation13 + $0xc0] sm:$0xff]
    %v1162 = vld [vmem:[#allocation13 + $0xc8] sm:$0xff]
    %v1163 = vld [vmem:[#allocation13 + $0xd0] sm:$0xff]
    %v1164 = vld [vmem:[#allocation13 + $0xd8] sm:$0xff]
    %v1165 = vld [vmem:[#allocation13 + $0xe0] sm:$0xff]
    %v1166 = vld [vmem:[#allocation13 + $0xe8] sm:$0xff]
    %v1167 = vld [vmem:[#allocation13 + $0xf0] sm:$0xff]
    %v1168 = vld [vmem:[#allocation13 + $0xf8] sm:$0xff]
    %v1169 = vld [vmem:[#allocation13 + $0x100] sm:$0xff]
    %v1170 = vld [vmem:[#allocation13 + $0x108] sm:$0xff]
    %v1171 = vld [vmem:[#allocation13 + $0x110] sm:$0xff]
    %v1172 = vld [vmem:[#allocation13 + $0x118] sm:$0xff]
    %v1173 = vld [vmem:[#allocation13 + $0x120] sm:$0xff]
    %v1174 = vld [vmem:[#allocation13 + $0x128] sm:$0xff]
    %v1175 = vld [vmem:[#allocation13 + $0x130] sm:$0xff]
    %v1176 = vld [vmem:[#allocation13 + $0x138] sm:$0xff]
    %v1177 = vld [vmem:[#allocation13 + $0x140] sm:$0xff]
    %v1178 = vld [vmem:[#allocation13 + $0x148] sm:$0xff]
    %v1179 = vld [vmem:[#allocation13 + $0x150] sm:$0xff]
    %v1180 = vld [vmem:[#allocation13 + $0x158] sm:$0xff]
    %v1181 = vld [vmem:[#allocation13 + $0x160] sm:$0xff]
    %v1182 = vld [vmem:[#allocation13 + $0x168] sm:$0xff]
    %v1183 = vld [vmem:[#allocation13 + $0x170] sm:$0xff]
    %v1184 = vld [vmem:[#allocation13 + $0x178] sm:$0xff]
    %v1185 = vld [vmem:[#allocation13 + $0x180] sm:$0xff]
    %v1186 = vld [vmem:[#allocation13 + $0x188] sm:$0xff]
    %v1187 = vld [vmem:[#allocation13 + $0x190] sm:$0xff]
    %v1188 = vld [vmem:[#allocation13 + $0x198] sm:$0xff]
    %v1189 = vld [vmem:[#allocation13 + $0x1a0] sm:$0xff]
    %v1190 = vld [vmem:[#allocation13 + $0x1a8] sm:$0xff]
    %v1191 = vld [vmem:[#allocation13 + $0x1b0] sm:$0xff]
    %v1192 = vld [vmem:[#allocation13 + $0x1b8] sm:$0xff]
    %v1193 = vld [vmem:[#allocation13 + $0x1c0] sm:$0xff]
    %v1194 = vld [vmem:[#allocation13 + $0x1c8] sm:$0xff]
    %v1195 = vld [vmem:[#allocation13 + $0x1d0] sm:$0xff]
    %v1196 = vld [vmem:[#allocation13 + $0x1d8] sm:$0xff]
    %v1197 = vld [vmem:[#allocation13 + $0x1e0] sm:$0xff]
    %v1198 = vld [vmem:[#allocation13 + $0x1e8] sm:$0xff]
    %v1199 = vld [vmem:[#allocation13 + $0x1f0] sm:$0xff]
    %v1200 = vld [vmem:[#allocation13 + $0x1f8] sm:$0xff]
    %v1201 = vld [vmem:[#allocation14] sm:$0xff]
    %v1202 = vld [vmem:[#allocation14 + $0x8] sm:$0xff]
    %v1203 = vld [vmem:[#allocation14 + $0x10] sm:$0xff]
    %v1204 = vld [vmem:[#allocation14 + $0x18] sm:$0xff]
    %v1205 = vld [vmem:[#allocation14 + $0x20] sm:$0xff]
    %v1206 = vld [vmem:[#allocation14 + $0x28] sm:$0xff]
    %v1207 = vld [vmem:[#allocation14 + $0x30] sm:$0xff]
    %v1208 = vld [vmem:[#allocation14 + $0x38] sm:$0xff]
    %v1209 = vld [vmem:[#allocation14 + $0x40] sm:$0xff]
    %v1210 = vld [vmem:[#allocation14 + $0x48] sm:$0xff]
    %v1211 = vld [vmem:[#allocation14 + $0x50] sm:$0xff]
    %v1212 = vld [vmem:[#allocation14 + $0x58] sm:$0xff]
    %v1213 = vld [vmem:[#allocation14 + $0x60] sm:$0xff]
    %v1214 = vld [vmem:[#allocation14 + $0x68] sm:$0xff]
    %v1215 = vld [vmem:[#allocation14 + $0x70] sm:$0xff]
    %v1216 = vld [vmem:[#allocation14 + $0x78] sm:$0xff]
    %v1217 = vld [vmem:[#allocation14 + $0x80] sm:$0xff]
    %v1218 = vld [vmem:[#allocation14 + $0x88] sm:$0xff]
    %v1219 = vld [vmem:[#allocation14 + $0x90] sm:$0xff]
    %v1220 = vld [vmem:[#allocation14 + $0x98] sm:$0xff]
    %v1221 = vld [vmem:[#allocation14 + $0xa0] sm:$0xff]
    %v1222 = vld [vmem:[#allocation14 + $0xa8] sm:$0xff]
    %v1223 = vld [vmem:[#allocation14 + $0xb0] sm:$0xff]
    %v1224 = vld [vmem:[#allocation14 + $0xb8] sm:$0xff]
    %v1225 = vld [vmem:[#allocation14 + $0xc0] sm:$0xff]
    %v1226 = vld [vmem:[#allocation14 + $0xc8] sm:$0xff]
    %v1227 = vld [vmem:[#allocation14 + $0xd0] sm:$0xff]
    %v1228 = vld [vmem:[#allocation14 + $0xd8] sm:$0xff]
    %v1229 = vld [vmem:[#allocation14 + $0xe0] sm:$0xff]
    %v1230 = vld [vmem:[#allocation14 + $0xe8] sm:$0xff]
    %v1231 = vld [vmem:[#allocation14 + $0xf0] sm:$0xff]
    %v1232 = vld [vmem:[#allocation14 + $0xf8] sm:$0xff]
    %v1233 = vld [vmem:[#allocation14 + $0x100] sm:$0xff]
    %v1234 = vld [vmem:[#allocation14 + $0x108] sm:$0xff]
    %v1235 = vld [vmem:[#allocation14 + $0x110] sm:$0xff]
    %v1236 = vld [vmem:[#allocation14 + $0x118] sm:$0xff]
    %v1237 = vld [vmem:[#allocation14 + $0x120] sm:$0xff]
    %v1238 = vld [vmem:[#allocation14 + $0x128] sm:$0xff]
    %v1239 = vld [vmem:[#allocation14 + $0x130] sm:$0xff]
    %v1240 = vld [vmem:[#allocation14 + $0x138] sm:$0xff]
    %v1241 = vld [vmem:[#allocation14 + $0x140] sm:$0xff]
    %v1242 = vld [vmem:[#allocation14 + $0x148] sm:$0xff]
    %v1243 = vld [vmem:[#allocation14 + $0x150] sm:$0xff]
    %v1244 = vld [vmem:[#allocation14 + $0x158] sm:$0xff]
    %v1245 = vld [vmem:[#allocation14 + $0x160] sm:$0xff]
    %v1246 = vld [vmem:[#allocation14 + $0x168] sm:$0xff]
    %v1247 = vld [vmem:[#allocation14 + $0x170] sm:$0xff]
    %v1248 = vld [vmem:[#allocation14 + $0x178] sm:$0xff]
    %v1249 = vld [vmem:[#allocation14 + $0x180] sm:$0xff]
    %v1250 = vld [vmem:[#allocation14 + $0x188] sm:$0xff]
    %v1251 = vld [vmem:[#allocation14 + $0x190] sm:$0xff]
    %v1252 = vld [vmem:[#allocation14 + $0x198] sm:$0xff]
    %v1253 = vld [vmem:[#allocation14 + $0x1a0] sm:$0xff]
    %v1254 = vld [vmem:[#allocation14 + $0x1a8] sm:$0xff]
    %v1255 = vld [vmem:[#allocation14 + $0x1b0] sm:$0xff]
    %v1256 = vld [vmem:[#allocation14 + $0x1b8] sm:$0xff]
    %v1257 = vld [vmem:[#allocation14 + $0x1c0] sm:$0xff]
    %v1258 = vld [vmem:[#allocation14 + $0x1c8] sm:$0xff]
    %v1259 = vld [vmem:[#allocation14 + $0x1d0] sm:$0xff]
    %v1260 = vld [vmem:[#allocation14 + $0x1d8] sm:$0xff]
    %v1261 = vld [vmem:[#allocation14 + $0x1e0] sm:$0xff]
    %v1262 = vld [vmem:[#allocation14 + $0x1e8] sm:$0xff]
    %v1263 = vld [vmem:[#allocation14 + $0x1f0] sm:$0xff]
    %v1264 = vld [vmem:[#allocation14 + $0x1f8] sm:$0xff]
    %1265 = vmatprep.subr.mxu0 %v1262
    %1266 = vmatpush1.msra.mxu0 %v1261
    %1267 = vmatprep.subr.mxu0 %v1258
    %1268 = vmatpush1.msra.mxu0 %v1257
    %1269 = vmatprep.subr.mxu0 %v1254
    %1270 = vmatpush1.msra.mxu0 %v1253
    %1271 = vmatprep.subr.mxu0 %v1250
    %1272 = vmatpush1.msra.mxu0 %v1249
    %1273 = vmatprep.subr.mxu0 %v1246
    %1274 = vmatpush1.msra.mxu0 %v1245
    %1275 = vmatprep.subr.mxu0 %v1242
    %1276 = vmatpush1.msra.mxu0 %v1241
    %1277 = vmatprep.subr.mxu0 %v1238
    %1278 = vmatpush1.msra.mxu0 %v1237
    %1279 = vmatprep.subr.mxu0 %v1234
    %1280 = vmatpush1.msra.mxu0 %v1233
    %1281 = vmatprep.subr.mxu0 %v1230
    %1282 = vmatpush1.msra.mxu0 %v1229
    %1283 = vmatprep.subr.mxu0 %v1226
    %1284 = vmatpush1.msra.mxu0 %v1225
    %1285 = vmatprep.subr.mxu0 %v1222
    %1286 = vmatpush1.msra.mxu0 %v1221
    %1287 = vmatprep.subr.mxu0 %v1218
    %1288 = vmatpush1.msra.mxu0 %v1217
    %1289 = vmatprep.subr.mxu0 %v1214
    %1290 = vmatpush1.msra.mxu0 %v1213
    %1291 = vmatprep.subr.mxu0 %v1210
    %1292 = vmatpush1.msra.mxu0 %v1209
    %1293 = vmatprep.subr.mxu0 %v1206
    %1294 = vmatpush1.msra.mxu0 %v1205
    %1295 = vmatprep.subr.mxu0 %v1202
    %1296 = vmatpush1.msra.mxu0 %v1201
    %1297 = vmatprep.subr.mxu0 0.0
    %1298 = vmatpush2.msra.mxu0 0.0
    %1299 = vmatprep.subr.mxu0 0.0
    %1300 = vmatpush2.msra.mxu0 0.0
    %1301 = vmatprep.subr.mxu0 0.0
    %1302 = vmatpush2.msra.mxu0 0.0
    %1303 = vmatprep.subr.mxu0 0.0
    %1304 = vmatpush2.msra.mxu0 0.0
    %1305 = vmatprep.subr.mxu0 0.0
    %1306 = vmatpush2.msra.mxu0 0.0
    %1307 = vmatprep.subr.mxu0 0.0
    %1308 = vmatpush2.msra.mxu0 0.0
    %1309 = vmatprep.subr.mxu0 0.0
    %1310 = vmatpush2.msra.mxu0 0.0
    %1311 = vmatprep.subr.mxu0 0.0
    %1312 = vmatpush2.msra.mxu0 0.0
    %1313 = vmatprep.subr.mxu0 0.0
    %1314 = vmatpush2.msra.mxu0 0.0
    %1315 = vmatprep.subr.mxu0 0.0
    %1316 = vmatpush2.msra.mxu0 0.0
    %1317 = vmatprep.subr.mxu0 0.0
    %1318 = vmatpush2.msra.mxu0 0.0
    %1319 = vmatprep.subr.mxu0 0.0
    %1320 = vmatpush2.msra.mxu0 0.0
    %1321 = vmatprep.subr.mxu0 0.0
    %1322 = vmatpush2.msra.mxu0 0.0
    %1323 = vmatprep.subr.mxu0 0.0
    %1324 = vmatpush2.msra.mxu0 0.0
    %1325 = vmatprep.subr.mxu0 0.0
    %1326 = vmatpush2.msra.mxu0 0.0
    %1327 = vmatprep.subr.mxu0 0.0
    %1328 = vmatpush2.msra.mxu0 0.0
    %1329 = vmatprep.mubr.f32.mxu0 0.0
    %1330 = vmatmul.mubr.f32.gmra.mxu0 %v1136
    %v1331 = vpop.f32.mrf.mxu0
    %v1332 = vadd.f32 0.0, %v1331
    %v1333 = vpop.f32.mrf.mxu0
    %v1334 = vadd.f32 0.0, %v1333
    %1335 = vdwg.mxu0
    %1336 = vmatprep.subr.mxu0 %v1264
    %1337 = vmatpush1.msra.mxu0 %v1263
    %1338 = vmatprep.subr.mxu0 %v1260
    %1339 = vmatpush1.msra.mxu0 %v1259
    %1340 = vmatprep.subr.mxu0 %v1256
    %1341 = vmatpush1.msra.mxu0 %v1255
    %1342 = vmatprep.subr.mxu0 %v1252
    %1343 = vmatpush1.msra.mxu0 %v1251
    %1344 = vmatprep.subr.mxu0 %v1248
    %1345 = vmatpush1.msra.mxu0 %v1247
    %1346 = vmatprep.subr.mxu0 %v1244
    %1347 = vmatpush1.msra.mxu0 %v1243
    %1348 = vmatprep.subr.mxu0 %v1240
    %1349 = vmatpush1.msra.mxu0 %v1239
    %1350 = vmatprep.subr.mxu0 %v1236
    %1351 = vmatpush1.msra.mxu0 %v1235
    %1352 = vmatprep.subr.mxu0 %v1232
    %1353 = vmatpush1.msra.mxu0 %v1231
    %1354 = vmatprep.subr.mxu0 %v1228
    %1355 = vmatpush1.msra.mxu0 %v1227
    %1356 = vmatprep.subr.mxu0 %v1224
    %1357 = vmatpush1.msra.mxu0 %v1223
    %1358 = vmatprep.subr.mxu0 %v1220
    %1359 = vmatpush1.msra.mxu0 %v1219
    %1360 = vmatprep.subr.mxu0 %v1216
    %1361 = vmatpush1.msra.mxu0 %v1215
    %1362 = vmatprep.subr.mxu0 %v1212
    %1363 = vmatpush1.msra.mxu0 %v1211
    %1364 = vmatprep.subr.mxu0 %v1208
    %1365 = vmatpush1.msra.mxu0 %v1207
    %1366 = vmatprep.subr.mxu0 %v1204
    %1367 = vmatpush1.msra.mxu0 %v1203
    %1368 = vmatprep.subr.mxu0 0.0
    %1369 = vmatpush2.msra.mxu0 0.0
    %1370 = vmatprep.subr.mxu0 0.0
    %1371 = vmatpush2.msra.mxu0 0.0
    %1372 = vmatprep.subr.mxu0 0.0
    %1373 = vmatpush2.msra.mxu0 0.0
    %1374 = vmatprep.subr.mxu0 0.0
    %1375 = vmatpush2.msra.mxu0 0.0
    %1376 = vmatprep.subr.mxu0 0.0
    %1377 = vmatpush2.msra.mxu0 0.0
    %1378 = vmatprep.subr.mxu0 0.0
    %1379 = vmatpush2.msra.mxu0 0.0
    %1380 = vmatprep.subr.mxu0 0.0
    %1381 = vmatpush2.msra.mxu0 0.0
    %1382 = vmatprep.subr.mxu0 0.0
    %1383 = vmatpush2.msra.mxu0 0.0
    %1384 = vmatprep.subr.mxu0 0.0
    %1385 = vmatpush2.msra.mxu0 0.0
    %1386 = vmatprep.subr.mxu0 0.0
    %1387 = vmatpush2.msra.mxu0 0.0
    %1388 = vmatprep.subr.mxu0 0.0
    %1389 = vmatpush2.msra.mxu0 0.0
    %1390 = vmatprep.subr.mxu0 0.0
    %1391 = vmatpush2.msra.mxu0 0.0
    %1392 = vmatprep.subr.mxu0 0.0
    %1393 = vmatpush2.msra.mxu0 0.0
    %1394 = vmatprep.subr.mxu0 0.0
    %1395 = vmatpush2.msra.mxu0 0.0
    %1396 = vmatprep.subr.mxu0 0.0
    %1397 = vmatpush2.msra.mxu0 0.0
    %1398 = vmatprep.subr.mxu0 0.0
    %1399 = vmatpush2.msra.mxu0 0.0
    %1400 = vmatprep.mubr.f32.mxu0 0.0
    %1401 = vmatmul.mubr.f32.gmra.mxu0 %v1136
    %v1402 = vpop.f32.mrf.mxu0
    %v1403 = vadd.f32 0.0, %v1402
    %v1404 = vpop.f32.mrf.mxu0
    %v1405 = vadd.f32 0.0, %v1404
    %1406 = vdwg.mxu0
    %1407 = vmatprep.subr.mxu0 %v1198
    %1408 = vmatpush1.msra.mxu0 %v1197
    %1409 = vmatprep.subr.mxu0 %v1194
    %1410 = vmatpush1.msra.mxu0 %v1193
    %1411 = vmatprep.subr.mxu0 %v1190
    %1412 = vmatpush1.msra.mxu0 %v1189
    %1413 = vmatprep.subr.mxu0 %v1186
    %1414 = vmatpush1.msra.mxu0 %v1185
    %1415 = vmatprep.subr.mxu0 %v1182
    %1416 = vmatpush1.msra.mxu0 %v1181
    %1417 = vmatprep.subr.mxu0 %v1178
    %1418 = vmatpush1.msra.mxu0 %v1177
    %1419 = vmatprep.subr.mxu0 %v1174
    %1420 = vmatpush1.msra.mxu0 %v1173
    %1421 = vmatprep.subr.mxu0 %v1170
    %1422 = vmatpush1.msra.mxu0 %v1169
    %1423 = vmatprep.subr.mxu0 %v1166
    %1424 = vmatpush1.msra.mxu0 %v1165
    %1425 = vmatprep.subr.mxu0 %v1162
    %1426 = vmatpush1.msra.mxu0 %v1161
    %1427 = vmatprep.subr.mxu0 %v1158
    %1428 = vmatpush1.msra.mxu0 %v1157
    %1429 = vmatprep.subr.mxu0 %v1154
    %1430 = vmatpush1.msra.mxu0 %v1153
    %1431 = vmatprep.subr.mxu0 %v1150
    %1432 = vmatpush1.msra.mxu0 %v1149
    %1433 = vmatprep.subr.mxu0 %v1146
    %1434 = vmatpush1.msra.mxu0 %v1145
    %1435 = vmatprep.subr.mxu0 %v1142
    %1436 = vmatpush1.msra.mxu0 %v1141
    %1437 = vmatprep.subr.mxu0 %v1138
    %1438 = vmatpush1.msra.mxu0 %v1137
    %1439 = vmatprep.subr.mxu0 0.0
    %1440 = vmatpush2.msra.mxu0 0.0
    %1441 = vmatprep.subr.mxu0 0.0
    %1442 = vmatpush2.msra.mxu0 0.0
    %1443 = vmatprep.subr.mxu0 0.0
    %1444 = vmatpush2.msra.mxu0 0.0
    %1445 = vmatprep.subr.mxu0 0.0
    %1446 = vmatpush2.msra.mxu0 0.0
    %1447 = vmatprep.subr.mxu0 0.0
    %1448 = vmatpush2.msra.mxu0 0.0
    %1449 = vmatprep.subr.mxu0 0.0
    %1450 = vmatpush2.msra.mxu0 0.0
    %1451 = vmatprep.subr.mxu0 0.0
    %1452 = vmatpush2.msra.mxu0 0.0
    %1453 = vmatprep.subr.mxu0 0.0
    %1454 = vmatpush2.msra.mxu0 0.0
    %1455 = vmatprep.subr.mxu0 0.0
    %1456 = vmatpush2.msra.mxu0 0.0
    %1457 = vmatprep.subr.mxu0 0.0
    %1458 = vmatpush2.msra.mxu0 0.0
    %1459 = vmatprep.subr.mxu0 0.0
    %1460 = vmatpush2.msra.mxu0 0.0
    %1461 = vmatprep.subr.mxu0 0.0
    %1462 = vmatpush2.msra.mxu0 0.0
    %1463 = vmatprep.subr.mxu0 0.0
    %1464 = vmatpush2.msra.mxu0 0.0
    %1465 = vmatprep.subr.mxu0 0.0
    %1466 = vmatpush2.msra.mxu0 0.0
    %1467 = vmatprep.subr.mxu0 0.0
    %1468 = vmatpush2.msra.mxu0 0.0
    %1469 = vmatprep.subr.mxu0 0.0
    %1470 = vmatpush2.msra.mxu0 0.0
    %1471 = vmatprep.mubr.f32.mxu0 0.0
    %1472 = vmatmul.mubr.f32.gmra.mxu0 %v1133
    %v1473 = vpop.f32.mrf.mxu0
    %v1474 = vadd.f32 %v1332, %v1473
    %v1475 = vpop.f32.mrf.mxu0
    %v1476 = vadd.f32 %v1334, %v1475
    %1477 = vdwg.mxu0
    %1478 = vmatprep.subr.mxu0 %v1200
    %1479 = vmatpush1.msra.mxu0 %v1199
    %1480 = vmatprep.subr.mxu0 %v1196
    %1481 = vmatpush1.msra.mxu0 %v1195
    %1482 = vmatprep.subr.mxu0 %v1192
    %1483 = vmatpush1.msra.mxu0 %v1191
    %1484 = vmatprep.subr.mxu0 %v1188
    %1485 = vmatpush1.msra.mxu0 %v1187
    %1486 = vmatprep.subr.mxu0 %v1184
    %1487 = vmatpush1.msra.mxu0 %v1183
    %1488 = vmatprep.subr.mxu0 %v1180
    %1489 = vmatpush1.msra.mxu0 %v1179
    %1490 = vmatprep.subr.mxu0 %v1176
    %1491 = vmatpush1.msra.mxu0 %v1175
    %1492 = vmatprep.subr.mxu0 %v1172
    %1493 = vmatpush1.msra.mxu0 %v1171
    %1494 = vmatprep.subr.mxu0 %v1168
    %1495 = vmatpush1.msra.mxu0 %v1167
    %1496 = vmatprep.subr.mxu0 %v1164
    %1497 = vmatpush1.msra.mxu0 %v1163
    %1498 = vmatprep.subr.mxu0 %v1160
    %1499 = vmatpush1.msra.mxu0 %v1159
    %1500 = vmatprep.subr.mxu0 %v1156
    %1501 = vmatpush1.msra.mxu0 %v1155
    %1502 = vmatprep.subr.mxu0 %v1152
    %1503 = vmatpush1.msra.mxu0 %v1151
    %1504 = vmatprep.subr.mxu0 %v1148
    %1505 = vmatpush1.msra.mxu0 %v1147
    %1506 = vmatprep.subr.mxu0 %v1144
    %1507 = vmatpush1.msra.mxu0 %v1143
    %1508 = vmatprep.subr.mxu0 %v1140
    %1509 = vmatpush1.msra.mxu0 %v1139
    %1510 = vmatprep.subr.mxu0 0.0
    %1511 = vmatpush2.msra.mxu0 0.0
    %1512 = vmatprep.subr.mxu0 0.0
    %1513 = vmatpush2.msra.mxu0 0.0
    %1514 = vmatprep.subr.mxu0 0.0
    %1515 = vmatpush2.msra.mxu0 0.0
    %1516 = vmatprep.subr.mxu0 0.0
    %1517 = vmatpush2.msra.mxu0 0.0
    %1518 = vmatprep.subr.mxu0 0.0
    %1519 = vmatpush2.msra.mxu0 0.0
    %1520 = vmatprep.subr.mxu0 0.0
    %1521 = vmatpush2.msra.mxu0 0.0
    %1522 = vmatprep.subr.mxu0 0.0
    %1523 = vmatpush2.msra.mxu0 0.0
    %1524 = vmatprep.subr.mxu0 0.0
    %1525 = vmatpush2.msra.mxu0 0.0
    %1526 = vmatprep.subr.mxu0 0.0
    %1527 = vmatpush2.msra.mxu0 0.0
    %1528 = vmatprep.subr.mxu0 0.0
    %1529 = vmatpush2.msra.mxu0 0.0
    %1530 = vmatprep.subr.mxu0 0.0
    %1531 = vmatpush2.msra.mxu0 0.0
    %1532 = vmatprep.subr.mxu0 0.0
    %1533 = vmatpush2.msra.mxu0 0.0
    %1534 = vmatprep.subr.mxu0 0.0
    %1535 = vmatpush2.msra.mxu0 0.0
    %1536 = vmatprep.subr.mxu0 0.0
    %1537 = vmatpush2.msra.mxu0 0.0
    %1538 = vmatprep.subr.mxu0 0.0
    %1539 = vmatpush2.msra.mxu0 0.0
    %1540 = vmatprep.subr.mxu0 0.0
    %1541 = vmatpush2.msra.mxu0 0.0
    %1542 = vmatprep.mubr.f32.mxu0 0.0
    %1543 = vmatmul.mubr.f32.gmra.mxu0 %v1133
    %v1544 = vpop.f32.mrf.mxu0
    %v1545 = vadd.f32 %v1403, %v1544
    %v1546 = vpop.f32.mrf.mxu0
    %v1547 = vadd.f32 %v1405, %v1546
    %1548 = vdwg.mxu0
    %v1549 = vadd.f32 %v1474, %v181
    %v1550 = vadd.f32 %v1476, %v182
    %v1551 = vadd.f32 %v1545, %v183
    %v1552 = vadd.f32 %v1547, %v184
    %v1553 = vmul.f32 %v1549, 0.5
    %v1554 = vmul.f32 %v1550, 0.5
    %v1555 = vtanh.pop %v1553
    %v1556 = vtanh.pop %v1554
    %v1557 = vmul.f32 %v1555, 0.5
    %v1558 = vmul.f32 %v1556, 0.5
    %v1559 = vadd.f32 %v1557, 0.5
    %v1560 = vadd.f32 %v1558, 0.5
    %v1561 = vmul.f32 %v1559, %v1552
    %v1562 = vadd.f32 %v1551, %v1561
    %v1563 = vtanh.pop %v1562
    %v1564 = vsub.f32 %v1136, %v1563
    %v1565 = vmul.f32 %v1560, %v1564
    %v1566 = vadd.f32 %v1563, %v1565
    %1567 = vst [vmem:[#allocation22] sm:$0xff] %v1566
    %s1568 = scalar_lea.vmem [#allocation7], 8
    %v1569 = vld [vmem:[%s1568] sm:$0xff]
    %s1570 = scalar_lea.vmem [#allocation13], 512
    %v1571 = vld [vmem:[%s1570] sm:$0xff]
    %v1572 = vld [vmem:[%s1570 + $0x8] sm:$0xff]
    %v1573 = vld [vmem:[%s1570 + $0x10] sm:$0xff]
    %v1574 = vld [vmem:[%s1570 + $0x18] sm:$0xff]
    %v1575 = vld [vmem:[%s1570 + $0x20] sm:$0xff]
    %v1576 = vld [vmem:[%s1570 + $0x28] sm:$0xff]
    %v1577 = vld [vmem:[%s1570 + $0x30] sm:$0xff]
    %v1578 = vld [vmem:[%s1570 + $0x38] sm:$0xff]
    %v1579 = vld [vmem:[%s1570 + $0x40] sm:$0xff]
    %v1580 = vld [vmem:[%s1570 + $0x48] sm:$0xff]
    %v1581 = vld [vmem:[%s1570 + $0x50] sm:$0xff]
    %v1582 = vld [vmem:[%s1570 + $0x58] sm:$0xff]
    %v1583 = vld [vmem:[%s1570 + $0x60] sm:$0xff]
    %v1584 = vld [vmem:[%s1570 + $0x68] sm:$0xff]
    %v1585 = vld [vmem:[%s1570 + $0x70] sm:$0xff]
    %v1586 = vld [vmem:[%s1570 + $0x78] sm:$0xff]
    %v1587 = vld [vmem:[%s1570 + $0x80] sm:$0xff]
    %v1588 = vld [vmem:[%s1570 + $0x88] sm:$0xff]
    %v1589 = vld [vmem:[%s1570 + $0x90] sm:$0xff]
    %v1590 = vld [vmem:[%s1570 + $0x98] sm:$0xff]
    %v1591 = vld [vmem:[%s1570 + $0xa0] sm:$0xff]
    %v1592 = vld [vmem:[%s1570 + $0xa8] sm:$0xff]
    %v1593 = vld [vmem:[%s1570 + $0xb0] sm:$0xff]
    %v1594 = vld [vmem:[%s1570 + $0xb8] sm:$0xff]
    %v1595 = vld [vmem:[%s1570 + $0xc0] sm:$0xff]
    %v1596 = vld [vmem:[%s1570 + $0xc8] sm:$0xff]
    %v1597 = vld [vmem:[%s1570 + $0xd0] sm:$0xff]
    %v1598 = vld [vmem:[%s1570 + $0xd8] sm:$0xff]
    %v1599 = vld [vmem:[%s1570 + $0xe0] sm:$0xff]
    %v1600 = vld [vmem:[%s1570 + $0xe8] sm:$0xff]
    %v1601 = vld [vmem:[%s1570 + $0xf0] sm:$0xff]
    %v1602 = vld [vmem:[%s1570 + $0xf8] sm:$0xff]
    %v1603 = vld [vmem:[%s1570 + $0x100] sm:$0xff]
    %v1604 = vld [vmem:[%s1570 + $0x108] sm:$0xff]
    %v1605 = vld [vmem:[%s1570 + $0x110] sm:$0xff]
    %v1606 = vld [vmem:[%s1570 + $0x118] sm:$0xff]
    %v1607 = vld [vmem:[%s1570 + $0x120] sm:$0xff]
    %v1608 = vld [vmem:[%s1570 + $0x128] sm:$0xff]
    %v1609 = vld [vmem:[%s1570 + $0x130] sm:$0xff]
    %v1610 = vld [vmem:[%s1570 + $0x138] sm:$0xff]
    %v1611 = vld [vmem:[%s1570 + $0x140] sm:$0xff]
    %v1612 = vld [vmem:[%s1570 + $0x148] sm:$0xff]
    %v1613 = vld [vmem:[%s1570 + $0x150] sm:$0xff]
    %v1614 = vld [vmem:[%s1570 + $0x158] sm:$0xff]
    %v1615 = vld [vmem:[%s1570 + $0x160] sm:$0xff]
    %v1616 = vld [vmem:[%s1570 + $0x168] sm:$0xff]
    %v1617 = vld [vmem:[%s1570 + $0x170] sm:$0xff]
    %v1618 = vld [vmem:[%s1570 + $0x178] sm:$0xff]
    %v1619 = vld [vmem:[%s1570 + $0x180] sm:$0xff]
    %v1620 = vld [vmem:[%s1570 + $0x188] sm:$0xff]
    %v1621 = vld [vmem:[%s1570 + $0x190] sm:$0xff]
    %v1622 = vld [vmem:[%s1570 + $0x198] sm:$0xff]
    %v1623 = vld [vmem:[%s1570 + $0x1a0] sm:$0xff]
    %v1624 = vld [vmem:[%s1570 + $0x1a8] sm:$0xff]
    %v1625 = vld [vmem:[%s1570 + $0x1b0] sm:$0xff]
    %v1626 = vld [vmem:[%s1570 + $0x1b8] sm:$0xff]
    %v1627 = vld [vmem:[%s1570 + $0x1c0] sm:$0xff]
    %v1628 = vld [vmem:[%s1570 + $0x1c8] sm:$0xff]
    %v1629 = vld [vmem:[%s1570 + $0x1d0] sm:$0xff]
    %v1630 = vld [vmem:[%s1570 + $0x1d8] sm:$0xff]
    %v1631 = vld [vmem:[%s1570 + $0x1e0] sm:$0xff]
    %v1632 = vld [vmem:[%s1570 + $0x1e8] sm:$0xff]
    %v1633 = vld [vmem:[%s1570 + $0x1f0] sm:$0xff]
    %v1634 = vld [vmem:[%s1570 + $0x1f8] sm:$0xff]
    %s1635 = scalar_lea.vmem [#allocation14], 512
    %v1636 = vld [vmem:[%s1635] sm:$0xff]
    %v1637 = vld [vmem:[%s1635 + $0x8] sm:$0xff]
    %v1638 = vld [vmem:[%s1635 + $0x10] sm:$0xff]
    %v1639 = vld [vmem:[%s1635 + $0x18] sm:$0xff]
    %v1640 = vld [vmem:[%s1635 + $0x20] sm:$0xff]
    %v1641 = vld [vmem:[%s1635 + $0x28] sm:$0xff]
    %v1642 = vld [vmem:[%s1635 + $0x30] sm:$0xff]
    %v1643 = vld [vmem:[%s1635 + $0x38] sm:$0xff]
    %v1644 = vld [vmem:[%s1635 + $0x40] sm:$0xff]
    %v1645 = vld [vmem:[%s1635 + $0x48] sm:$0xff]
    %v1646 = vld [vmem:[%s1635 + $0x50] sm:$0xff]
    %v1647 = vld [vmem:[%s1635 + $0x58] sm:$0xff]
    %v1648 = vld [vmem:[%s1635 + $0x60] sm:$0xff]
    %v1649 = vld [vmem:[%s1635 + $0x68] sm:$0xff]
    %v1650 = vld [vmem:[%s1635 + $0x70] sm:$0xff]
    %v1651 = vld [vmem:[%s1635 + $0x78] sm:$0xff]
    %v1652 = vld [vmem:[%s1635 + $0x80] sm:$0xff]
    %v1653 = vld [vmem:[%s1635 + $0x88] sm:$0xff]
    %v1654 = vld [vmem:[%s1635 + $0x90] sm:$0xff]
    %v1655 = vld [vmem:[%s1635 + $0x98] sm:$0xff]
    %v1656 = vld [vmem:[%s1635 + $0xa0] sm:$0xff]
    %v1657 = vld [vmem:[%s1635 + $0xa8] sm:$0xff]
    %v1658 = vld [vmem:[%s1635 + $0xb0] sm:$0xff]
    %v1659 = vld [vmem:[%s1635 + $0xb8] sm:$0xff]
    %v1660 = vld [vmem:[%s1635 + $0xc0] sm:$0xff]
    %v1661 = vld [vmem:[%s1635 + $0xc8] sm:$0xff]
    %v1662 = vld [vmem:[%s1635 + $0xd0] sm:$0xff]
    %v1663 = vld [vmem:[%s1635 + $0xd8] sm:$0xff]
    %v1664 = vld [vmem:[%s1635 + $0xe0] sm:$0xff]
    %v1665 = vld [vmem:[%s1635 + $0xe8] sm:$0xff]
    %v1666 = vld [vmem:[%s1635 + $0xf0] sm:$0xff]
    %v1667 = vld [vmem:[%s1635 + $0xf8] sm:$0xff]
    %v1668 = vld [vmem:[%s1635 + $0x100] sm:$0xff]
    %v1669 = vld [vmem:[%s1635 + $0x108] sm:$0xff]
    %v1670 = vld [vmem:[%s1635 + $0x110] sm:$0xff]
    %v1671 = vld [vmem:[%s1635 + $0x118] sm:$0xff]
    %v1672 = vld [vmem:[%s1635 + $0x120] sm:$0xff]
    %v1673 = vld [vmem:[%s1635 + $0x128] sm:$0xff]
    %v1674 = vld [vmem:[%s1635 + $0x130] sm:$0xff]
    %v1675 = vld [vmem:[%s1635 + $0x138] sm:$0xff]
    %v1676 = vld [vmem:[%s1635 + $0x140] sm:$0xff]
    %v1677 = vld [vmem:[%s1635 + $0x148] sm:$0xff]
    %v1678 = vld [vmem:[%s1635 + $0x150] sm:$0xff]
    %v1679 = vld [vmem:[%s1635 + $0x158] sm:$0xff]
    %v1680 = vld [vmem:[%s1635 + $0x160] sm:$0xff]
    %v1681 = vld [vmem:[%s1635 + $0x168] sm:$0xff]
    %v1682 = vld [vmem:[%s1635 + $0x170] sm:$0xff]
    %v1683 = vld [vmem:[%s1635 + $0x178] sm:$0xff]
    %v1684 = vld [vmem:[%s1635 + $0x180] sm:$0xff]
    %v1685 = vld [vmem:[%s1635 + $0x188] sm:$0xff]
    %v1686 = vld [vmem:[%s1635 + $0x190] sm:$0xff]
    %v1687 = vld [vmem:[%s1635 + $0x198] sm:$0xff]
    %v1688 = vld [vmem:[%s1635 + $0x1a0] sm:$0xff]
    %v1689 = vld [vmem:[%s1635 + $0x1a8] sm:$0xff]
    %v1690 = vld [vmem:[%s1635 + $0x1b0] sm:$0xff]
    %v1691 = vld [vmem:[%s1635 + $0x1b8] sm:$0xff]
    %v1692 = vld [vmem:[%s1635 + $0x1c0] sm:$0xff]
    %v1693 = vld [vmem:[%s1635 + $0x1c8] sm:$0xff]
    %v1694 = vld [vmem:[%s1635 + $0x1d0] sm:$0xff]
    %v1695 = vld [vmem:[%s1635 + $0x1d8] sm:$0xff]
    %v1696 = vld [vmem:[%s1635 + $0x1e0] sm:$0xff]
    %v1697 = vld [vmem:[%s1635 + $0x1e8] sm:$0xff]
    %v1698 = vld [vmem:[%s1635 + $0x1f0] sm:$0xff]
    %v1699 = vld [vmem:[%s1635 + $0x1f8] sm:$0xff]
    %1700 = vmatprep.subr.mxu0 %v1697
    %1701 = vmatpush1.msra.mxu0 %v1696
    %1702 = vmatprep.subr.mxu0 %v1693
    %1703 = vmatpush1.msra.mxu0 %v1692
    %1704 = vmatprep.subr.mxu0 %v1689
    %1705 = vmatpush1.msra.mxu0 %v1688
    %1706 = vmatprep.subr.mxu0 %v1685
    %1707 = vmatpush1.msra.mxu0 %v1684
    %1708 = vmatprep.subr.mxu0 %v1681
    %1709 = vmatpush1.msra.mxu0 %v1680
    %1710 = vmatprep.subr.mxu0 %v1677
    %1711 = vmatpush1.msra.mxu0 %v1676
    %1712 = vmatprep.subr.mxu0 %v1673
    %1713 = vmatpush1.msra.mxu0 %v1672
    %1714 = vmatprep.subr.mxu0 %v1669
    %1715 = vmatpush1.msra.mxu0 %v1668
    %1716 = vmatprep.subr.mxu0 %v1665
    %1717 = vmatpush1.msra.mxu0 %v1664
    %1718 = vmatprep.subr.mxu0 %v1661
    %1719 = vmatpush1.msra.mxu0 %v1660
    %1720 = vmatprep.subr.mxu0 %v1657
    %1721 = vmatpush1.msra.mxu0 %v1656
    %1722 = vmatprep.subr.mxu0 %v1653
    %1723 = vmatpush1.msra.mxu0 %v1652
    %1724 = vmatprep.subr.mxu0 %v1649
    %1725 = vmatpush1.msra.mxu0 %v1648
    %1726 = vmatprep.subr.mxu0 %v1645
    %1727 = vmatpush1.msra.mxu0 %v1644
    %1728 = vmatprep.subr.mxu0 %v1641
    %1729 = vmatpush1.msra.mxu0 %v1640
    %1730 = vmatprep.subr.mxu0 %v1637
    %1731 = vmatpush1.msra.mxu0 %v1636
    %1732 = vmatprep.subr.mxu0 0.0
    %1733 = vmatpush2.msra.mxu0 0.0
    %1734 = vmatprep.subr.mxu0 0.0
    %1735 = vmatpush2.msra.mxu0 0.0
    %1736 = vmatprep.subr.mxu0 0.0
    %1737 = vmatpush2.msra.mxu0 0.0
    %1738 = vmatprep.subr.mxu0 0.0
    %1739 = vmatpush2.msra.mxu0 0.0
    %1740 = vmatprep.subr.mxu0 0.0
    %1741 = vmatpush2.msra.mxu0 0.0
    %1742 = vmatprep.subr.mxu0 0.0
    %1743 = vmatpush2.msra.mxu0 0.0
    %1744 = vmatprep.subr.mxu0 0.0
    %1745 = vmatpush2.msra.mxu0 0.0
    %1746 = vmatprep.subr.mxu0 0.0
    %1747 = vmatpush2.msra.mxu0 0.0
    %1748 = vmatprep.subr.mxu0 0.0
    %1749 = vmatpush2.msra.mxu0 0.0
    %1750 = vmatprep.subr.mxu0 0.0
    %1751 = vmatpush2.msra.mxu0 0.0
    %1752 = vmatprep.subr.mxu0 0.0
    %1753 = vmatpush2.msra.mxu0 0.0
    %1754 = vmatprep.subr.mxu0 0.0
    %1755 = vmatpush2.msra.mxu0 0.0
    %1756 = vmatprep.subr.mxu0 0.0
    %1757 = vmatpush2.msra.mxu0 0.0
    %1758 = vmatprep.subr.mxu0 0.0
    %1759 = vmatpush2.msra.mxu0 0.0
    %1760 = vmatprep.subr.mxu0 0.0
    %1761 = vmatpush2.msra.mxu0 0.0
    %1762 = vmatprep.subr.mxu0 0.0
    %1763 = vmatpush2.msra.mxu0 0.0
    %1764 = vmatprep.mubr.f32.mxu0 0.0
    %1765 = vmatmul.mubr.f32.gmra.mxu0 %v1569
    %v1766 = vpop.f32.mrf.mxu0
    %v1767 = vadd.f32 0.0, %v1766
    %v1768 = vpop.f32.mrf.mxu0
    %v1769 = vadd.f32 0.0, %v1768
    %1770 = vdwg.mxu0
    %1771 = vmatprep.subr.mxu0 %v1699
    %1772 = vmatpush1.msra.mxu0 %v1698
    %1773 = vmatprep.subr.mxu0 %v1695
    %1774 = vmatpush1.msra.mxu0 %v1694
    %1775 = vmatprep.subr.mxu0 %v1691
    %1776 = vmatpush1.msra.mxu0 %v1690
    %1777 = vmatprep.subr.mxu0 %v1687
    %1778 = vmatpush1.msra.mxu0 %v1686
    %1779 = vmatprep.subr.mxu0 %v1683
    %1780 = vmatpush1.msra.mxu0 %v1682
    %1781 = vmatprep.subr.mxu0 %v1679
    %1782 = vmatpush1.msra.mxu0 %v1678
    %1783 = vmatprep.subr.mxu0 %v1675
    %1784 = vmatpush1.msra.mxu0 %v1674
    %1785 = vmatprep.subr.mxu0 %v1671
    %1786 = vmatpush1.msra.mxu0 %v1670
    %1787 = vmatprep.subr.mxu0 %v1667
    %1788 = vmatpush1.msra.mxu0 %v1666
    %1789 = vmatprep.subr.mxu0 %v1663
    %1790 = vmatpush1.msra.mxu0 %v1662
    %1791 = vmatprep.subr.mxu0 %v1659
    %1792 = vmatpush1.msra.mxu0 %v1658
    %1793 = vmatprep.subr.mxu0 %v1655
    %1794 = vmatpush1.msra.mxu0 %v1654
    %1795 = vmatprep.subr.mxu0 %v1651
    %1796 = vmatpush1.msra.mxu0 %v1650
    %1797 = vmatprep.subr.mxu0 %v1647
    %1798 = vmatpush1.msra.mxu0 %v1646
    %1799 = vmatprep.subr.mxu0 %v1643
    %1800 = vmatpush1.msra.mxu0 %v1642
    %1801 = vmatprep.subr.mxu0 %v1639
    %1802 = vmatpush1.msra.mxu0 %v1638
    %1803 = vmatprep.subr.mxu0 0.0
    %1804 = vmatpush2.msra.mxu0 0.0
    %1805 = vmatprep.subr.mxu0 0.0
    %1806 = vmatpush2.msra.mxu0 0.0
    %1807 = vmatprep.subr.mxu0 0.0
    %1808 = vmatpush2.msra.mxu0 0.0
    %1809 = vmatprep.subr.mxu0 0.0
    %1810 = vmatpush2.msra.mxu0 0.0
    %1811 = vmatprep.subr.mxu0 0.0
    %1812 = vmatpush2.msra.mxu0 0.0
    %1813 = vmatprep.subr.mxu0 0.0
    %1814 = vmatpush2.msra.mxu0 0.0
    %1815 = vmatprep.subr.mxu0 0.0
    %1816 = vmatpush2.msra.mxu0 0.0
    %1817 = vmatprep.subr.mxu0 0.0
    %1818 = vmatpush2.msra.mxu0 0.0
    %1819 = vmatprep.subr.mxu0 0.0
    %1820 = vmatpush2.msra.mxu0 0.0
    %1821 = vmatprep.subr.mxu0 0.0
    %1822 = vmatpush2.msra.mxu0 0.0
    %1823 = vmatprep.subr.mxu0 0.0
    %1824 = vmatpush2.msra.mxu0 0.0
    %1825 = vmatprep.subr.mxu0 0.0
    %1826 = vmatpush2.msra.mxu0 0.0
    %1827 = vmatprep.subr.mxu0 0.0
    %1828 = vmatpush2.msra.mxu0 0.0
    %1829 = vmatprep.subr.mxu0 0.0
    %1830 = vmatpush2.msra.mxu0 0.0
    %1831 = vmatprep.subr.mxu0 0.0
    %1832 = vmatpush2.msra.mxu0 0.0
    %1833 = vmatprep.subr.mxu0 0.0
    %1834 = vmatpush2.msra.mxu0 0.0
    %1835 = vmatprep.mubr.f32.mxu0 0.0
    %1836 = vmatmul.mubr.f32.gmra.mxu0 %v1569
    %v1837 = vpop.f32.mrf.mxu0
    %v1838 = vadd.f32 0.0, %v1837
    %v1839 = vpop.f32.mrf.mxu0
    %v1840 = vadd.f32 0.0, %v1839
    %1841 = vdwg.mxu0
    %1842 = vmatprep.subr.mxu0 %v1632
    %1843 = vmatpush1.msra.mxu0 %v1631
    %1844 = vmatprep.subr.mxu0 %v1628
    %1845 = vmatpush1.msra.mxu0 %v1627
    %1846 = vmatprep.subr.mxu0 %v1624
    %1847 = vmatpush1.msra.mxu0 %v1623
    %1848 = vmatprep.subr.mxu0 %v1620
    %1849 = vmatpush1.msra.mxu0 %v1619
    %1850 = vmatprep.subr.mxu0 %v1616
    %1851 = vmatpush1.msra.mxu0 %v1615
    %1852 = vmatprep.subr.mxu0 %v1612
    %1853 = vmatpush1.msra.mxu0 %v1611
    %1854 = vmatprep.subr.mxu0 %v1608
    %1855 = vmatpush1.msra.mxu0 %v1607
    %1856 = vmatprep.subr.mxu0 %v1604
    %1857 = vmatpush1.msra.mxu0 %v1603
    %1858 = vmatprep.subr.mxu0 %v1600
    %1859 = vmatpush1.msra.mxu0 %v1599
    %1860 = vmatprep.subr.mxu0 %v1596
    %1861 = vmatpush1.msra.mxu0 %v1595
    %1862 = vmatprep.subr.mxu0 %v1592
    %1863 = vmatpush1.msra.mxu0 %v1591
    %1864 = vmatprep.subr.mxu0 %v1588
    %1865 = vmatpush1.msra.mxu0 %v1587
    %1866 = vmatprep.subr.mxu0 %v1584
    %1867 = vmatpush1.msra.mxu0 %v1583
    %1868 = vmatprep.subr.mxu0 %v1580
    %1869 = vmatpush1.msra.mxu0 %v1579
    %1870 = vmatprep.subr.mxu0 %v1576
    %1871 = vmatpush1.msra.mxu0 %v1575
    %1872 = vmatprep.subr.mxu0 %v1572
    %1873 = vmatpush1.msra.mxu0 %v1571
    %1874 = vmatprep.subr.mxu0 0.0
    %1875 = vmatpush2.msra.mxu0 0.0
    %1876 = vmatprep.subr.mxu0 0.0
    %1877 = vmatpush2.msra.mxu0 0.0
    %1878 = vmatprep.subr.mxu0 0.0
    %1879 = vmatpush2.msra.mxu0 0.0
    %1880 = vmatprep.subr.mxu0 0.0
    %1881 = vmatpush2.msra.mxu0 0.0
    %1882 = vmatprep.subr.mxu0 0.0
    %1883 = vmatpush2.msra.mxu0 0.0
    %1884 = vmatprep.subr.mxu0 0.0
    %1885 = vmatpush2.msra.mxu0 0.0
    %1886 = vmatprep.subr.mxu0 0.0
    %1887 = vmatpush2.msra.mxu0 0.0
    %1888 = vmatprep.subr.mxu0 0.0
    %1889 = vmatpush2.msra.mxu0 0.0
    %1890 = vmatprep.subr.mxu0 0.0
    %1891 = vmatpush2.msra.mxu0 0.0
    %1892 = vmatprep.subr.mxu0 0.0
    %1893 = vmatpush2.msra.mxu0 0.0
    %1894 = vmatprep.subr.mxu0 0.0
    %1895 = vmatpush2.msra.mxu0 0.0
    %1896 = vmatprep.subr.mxu0 0.0
    %1897 = vmatpush2.msra.mxu0 0.0
    %1898 = vmatprep.subr.mxu0 0.0
    %1899 = vmatpush2.msra.mxu0 0.0
    %1900 = vmatprep.subr.mxu0 0.0
    %1901 = vmatpush2.msra.mxu0 0.0
    %1902 = vmatprep.subr.mxu0 0.0
    %1903 = vmatpush2.msra.mxu0 0.0
    %1904 = vmatprep.subr.mxu0 0.0
    %1905 = vmatpush2.msra.mxu0 0.0
    %1906 = vmatprep.mubr.f32.mxu0 0.0
    %1907 = vmatmul.mubr.f32.gmra.mxu0 %v1566
    %v1908 = vpop.f32.mrf.mxu0
    %v1909 = vadd.f32 %v1767, %v1908
    %v1910 = vpop.f32.mrf.mxu0
    %v1911 = vadd.f32 %v1769, %v1910
    %1912 = vdwg.mxu0
    %1913 = vmatprep.subr.mxu0 %v1634
    %1914 = vmatpush1.msra.mxu0 %v1633
    %1915 = vmatprep.subr.mxu0 %v1630
    %1916 = vmatpush1.msra.mxu0 %v1629
    %1917 = vmatprep.subr.mxu0 %v1626
    %1918 = vmatpush1.msra.mxu0 %v1625
    %1919 = vmatprep.subr.mxu0 %v1622
    %1920 = vmatpush1.msra.mxu0 %v1621
    %1921 = vmatprep.subr.mxu0 %v1618
    %1922 = vmatpush1.msra.mxu0 %v1617
    %1923 = vmatprep.subr.mxu0 %v1614
    %1924 = vmatpush1.msra.mxu0 %v1613
    %1925 = vmatprep.subr.mxu0 %v1610
    %1926 = vmatpush1.msra.mxu0 %v1609
    %1927 = vmatprep.subr.mxu0 %v1606
    %1928 = vmatpush1.msra.mxu0 %v1605
    %1929 = vmatprep.subr.mxu0 %v1602
    %1930 = vmatpush1.msra.mxu0 %v1601
    %1931 = vmatprep.subr.mxu0 %v1598
    %1932 = vmatpush1.msra.mxu0 %v1597
    %1933 = vmatprep.subr.mxu0 %v1594
    %1934 = vmatpush1.msra.mxu0 %v1593
    %1935 = vmatprep.subr.mxu0 %v1590
    %1936 = vmatpush1.msra.mxu0 %v1589
    %1937 = vmatprep.subr.mxu0 %v1586
    %1938 = vmatpush1.msra.mxu0 %v1585
    %1939 = vmatprep.subr.mxu0 %v1582
    %1940 = vmatpush1.msra.mxu0 %v1581
    %1941 = vmatprep.subr.mxu0 %v1578
    %1942 = vmatpush1.msra.mxu0 %v1577
    %1943 = vmatprep.subr.mxu0 %v1574
    %1944 = vmatpush1.msra.mxu0 %v1573
    %1945 = vmatprep.subr.mxu0 0.0
    %1946 = vmatpush2.msra.mxu0 0.0
    %1947 = vmatprep.subr.mxu0 0.0
    %1948 = vmatpush2.msra.mxu0 0.0
    %1949 = vmatprep.subr.mxu0 0.0
    %1950 = vmatpush2.msra.mxu0 0.0
    %1951 = vmatprep.subr.mxu0 0.0
    %1952 = vmatpush2.msra.mxu0 0.0
    %1953 = vmatprep.subr.mxu0 0.0
    %1954 = vmatpush2.msra.mxu0 0.0
    %1955 = vmatprep.subr.mxu0 0.0
    %1956 = vmatpush2.msra.mxu0 0.0
    %1957 = vmatprep.subr.mxu0 0.0
    %1958 = vmatpush2.msra.mxu0 0.0
    %1959 = vmatprep.subr.mxu0 0.0
    %1960 = vmatpush2.msra.mxu0 0.0
    %1961 = vmatprep.subr.mxu0 0.0
    %1962 = vmatpush2.msra.mxu0 0.0
    %1963 = vmatprep.subr.mxu0 0.0
    %1964 = vmatpush2.msra.mxu0 0.0
    %1965 = vmatprep.subr.mxu0 0.0
    %1966 = vmatpush2.msra.mxu0 0.0
    %1967 = vmatprep.subr.mxu0 0.0
    %1968 = vmatpush2.msra.mxu0 0.0
    %1969 = vmatprep.subr.mxu0 0.0
    %1970 = vmatpush2.msra.mxu0 0.0
    %1971 = vmatprep.subr.mxu0 0.0
    %1972 = vmatpush2.msra.mxu0 0.0
    %1973 = vmatprep.subr.mxu0 0.0
    %1974 = vmatpush2.msra.mxu0 0.0
    %1975 = vmatprep.subr.mxu0 0.0
    %1976 = vmatpush2.msra.mxu0 0.0
    %1977 = vmatprep.mubr.f32.mxu0 0.0
    %1978 = vmatmul.mubr.f32.gmra.mxu0 %v1566
    %v1979 = vpop.f32.mrf.mxu0
    %v1980 = vadd.f32 %v1838, %v1979
    %v1981 = vpop.f32.mrf.mxu0
    %v1982 = vadd.f32 %v1840, %v1981
    %1983 = vdwg.mxu0
    %v1984 = vadd.f32 %v1909, %v185
    %v1985 = vadd.f32 %v1911, %v186
    %v1986 = vadd.f32 %v1980, %v187
    %v1987 = vadd.f32 %v1982, %v188
    %v1988 = vmul.f32 %v1984, 0.5
    %v1989 = vmul.f32 %v1985, 0.5
    %v1990 = vtanh.pop %v1988
    %v1991 = vtanh.pop %v1989
    %v1992 = vmul.f32 %v1990, 0.5
    %v1993 = vmul.f32 %v1991, 0.5
    %v1994 = vadd.f32 %v1992, 0.5
    %v1995 = vadd.f32 %v1993, 0.5
    %v1996 = vmul.f32 %v1994, %v1987
    %v1997 = vadd.f32 %v1986, %v1996
    %v1998 = vtanh.pop %v1997
    %v1999 = vsub.f32 %v1569, %v1998
    %v2000 = vmul.f32 %v1995, %v1999
    %v2001 = vadd.f32 %v1998, %v2000
    %s2002 = scalar_lea.vmem [#allocation22], 8
    %2003 = vst [vmem:[%s2002] sm:$0xff] %v2001
    %v2004 = vld [vmem:[#allocation16] sm:$0xff]
    %v2005 = vld [vmem:[#allocation16 + $0x8] sm:$0xff]
    %v2006 = vld [vmem:[#allocation16 + $0x10] sm:$0xff]
    %v2007 = vld [vmem:[#allocation16 + $0x18] sm:$0xff]
    %v2008 = vld [vmem:[#allocation16 + $0x20] sm:$0xff]
    %v2009 = vld [vmem:[#allocation16 + $0x28] sm:$0xff]
    %v2010 = vld [vmem:[#allocation16 + $0x30] sm:$0xff]
    %v2011 = vld [vmem:[#allocation16 + $0x38] sm:$0xff]
    %v2012 = vld [vmem:[#allocation16 + $0x40] sm:$0xff]
    %v2013 = vld [vmem:[#allocation16 + $0x48] sm:$0xff]
    %v2014 = vld [vmem:[#allocation16 + $0x50] sm:$0xff]
    %v2015 = vld [vmem:[#allocation16 + $0x58] sm:$0xff]
    %v2016 = vld [vmem:[#allocation16 + $0x60] sm:$0xff]
    %v2017 = vld [vmem:[#allocation16 + $0x68] sm:$0xff]
    %v2018 = vld [vmem:[#allocation16 + $0x70] sm:$0xff]
    %v2019 = vld [vmem:[#allocation16 + $0x78] sm:$0xff]
    %2020 = vmatprep.subr.mxu0 0.0
    %2021 = vmatpush1.msra.mxu0 %v2019
    %2022 = vmatprep.subr.mxu0 0.0
    %2023 = vmatpush1.msra.mxu0 %v2018
    %2024 = vmatprep.subr.mxu0 0.0
    %2025 = vmatpush1.msra.mxu0 %v2017
    %2026 = vmatprep.subr.mxu0 0.0
    %2027 = vmatpush1.msra.mxu0 %v2016
    %2028 = vmatprep.subr.mxu0 0.0
    %2029 = vmatpush1.msra.mxu0 %v2015
    %2030 = vmatprep.subr.mxu0 0.0
    %2031 = vmatpush1.msra.mxu0 %v2014
    %2032 = vmatprep.subr.mxu0 0.0
    %2033 = vmatpush1.msra.mxu0 %v2013
    %2034 = vmatprep.subr.mxu0 0.0
    %2035 = vmatpush1.msra.mxu0 %v2012
    %2036 = vmatprep.subr.mxu0 0.0
    %2037 = vmatpush1.msra.mxu0 %v2011
    %2038 = vmatprep.subr.mxu0 0.0
    %2039 = vmatpush1.msra.mxu0 %v2010
    %2040 = vmatprep.subr.mxu0 0.0
    %2041 = vmatpush1.msra.mxu0 %v2009
    %2042 = vmatprep.subr.mxu0 0.0
    %2043 = vmatpush1.msra.mxu0 %v2008
    %2044 = vmatprep.subr.mxu0 0.0
    %2045 = vmatpush1.msra.mxu0 %v2007
    %2046 = vmatprep.subr.mxu0 0.0
    %2047 = vmatpush1.msra.mxu0 %v2006
    %2048 = vmatprep.subr.mxu0 0.0
    %2049 = vmatpush1.msra.mxu0 %v2005
    %2050 = vmatprep.subr.mxu0 0.0
    %2051 = vmatpush1.msra.mxu0 %v2004
    %2052 = vmatprep.subr.mxu0 0.0
    %2053 = vmatpush2.msra.mxu0 0.0
    %2054 = vmatprep.subr.mxu0 0.0
    %2055 = vmatpush2.msra.mxu0 0.0
    %2056 = vmatprep.subr.mxu0 0.0
    %2057 = vmatpush2.msra.mxu0 0.0
    %2058 = vmatprep.subr.mxu0 0.0
    %2059 = vmatpush2.msra.mxu0 0.0
    %2060 = vmatprep.subr.mxu0 0.0
    %2061 = vmatpush2.msra.mxu0 0.0
    %2062 = vmatprep.subr.mxu0 0.0
    %2063 = vmatpush2.msra.mxu0 0.0
    %2064 = vmatprep.subr.mxu0 0.0
    %2065 = vmatpush2.msra.mxu0 0.0
    %2066 = vmatprep.subr.mxu0 0.0
    %2067 = vmatpush2.msra.mxu0 0.0
    %2068 = vmatprep.subr.mxu0 0.0
    %2069 = vmatpush2.msra.mxu0 0.0
    %2070 = vmatprep.subr.mxu0 0.0
    %2071 = vmatpush2.msra.mxu0 0.0
    %2072 = vmatprep.subr.mxu0 0.0
    %2073 = vmatpush2.msra.mxu0 0.0
    %2074 = vmatprep.subr.mxu0 0.0
    %2075 = vmatpush2.msra.mxu0 0.0
    %2076 = vmatprep.subr.mxu0 0.0
    %2077 = vmatpush2.msra.mxu0 0.0
    %2078 = vmatprep.subr.mxu0 0.0
    %2079 = vmatpush2.msra.mxu0 0.0
    %2080 = vmatprep.subr.mxu0 0.0
    %2081 = vmatpush2.msra.mxu0 0.0
    %2082 = vmatprep.subr.mxu0 0.0
    %2083 = vmatpush2.msra.mxu0 0.0
    %2084 = vmatprep.mubr.f32.mxu0 0.0
    %2085 = vmatmul.mubr.f32.gmra.mxu0 %v2001
    %v2086 = vpop.f32.mrf.mxu0
    %v2087 = vadd.f32 %v189, %v2086
    %v2088 = vpop.f32.mrf.mxu0
    %2089 = vdwg.mxu0
    %2090 = vst [vmem:[#allocation19] sm:$0xff] %v2087
    // Predicated region
    $region82: #{tpu_custom_call.1} parent=1 // pred_check
      _
    $region83: #{tpu_custom_call.1} parent=1 // pred_check_branch
      %2092 = sbr.rel (0) target = $region85
    $region84: #{tpu_custom_call.1} parent=1 // pred_region
      %s2094 = ssub.s32 128, 128
      %2095 = vsyncadd [#allocation4], %s2094
      %s2097 = sshll.u32 [#allocation19], 4
      %s2098 = int_to_ptr.vmem [resolvable:$true] %s2097
      %2100 = dma.vmem_to_hbm [thread:$0]  %s2098, 128, %s10, [#allocation4]
    $region85: #{tpu_custom_call.1} parent=1 // pred_fallthru
      _
    // Predicated region
    $region86: #{tpu_custom_call.1} parent=1 // pred_check
      _
    $region87: #{tpu_custom_call.1} parent=1 // pred_check_branch
      %2102 = sbr.rel (0) target = $region89
    $region88: #{tpu_custom_call.1} parent=1 // pred_region
      %s2104 = ssub.s32 256, 256
      %2105 = vsyncadd [#allocation21], %s2104
      %s2106 = sshll.u32 [#allocation20], 4
      %s2107 = int_to_ptr.vmem [resolvable:$true] %s2106
      %2112 = dma.vmem_to_hbm [thread:$0]  %s2107, 256, %s11, [#allocation21], 128, 128, 8
    $region89: #{tpu_custom_call.1} parent=1 // pred_fallthru
      _
    // Predicated region
    $region90: #{tpu_custom_call.1} parent=1 // pred_check
      _
    $region91: #{tpu_custom_call.1} parent=1 // pred_check_branch
      %2114 = sbr.rel (0) target = $region93
    $region92: #{tpu_custom_call.1} parent=1 // pred_region
      %s2116 = ssub.s32 256, 256
      %2117 = vsyncadd [#allocation21], %s2116
      %s2118 = sshll.u32 [#allocation22], 4
      %s2119 = int_to_ptr.vmem [resolvable:$true] %s2118
      %2124 = dma.vmem_to_hbm [thread:$0]  %s2119, 256, %s12, [#allocation21], 128, 128, 8
    $region93: #{tpu_custom_call.1} parent=1 // pred_fallthru
      _
    // Predicated region
    $region94: #{tpu_custom_call.1} parent=1 // pred_check
      _
    $region95: #{tpu_custom_call.1} parent=1 // pred_check_branch
      %2126 = sbr.rel (0) target = $region97
    $region96: #{tpu_custom_call.1} parent=1 // pred_region
      %2127 = dma.done [#allocation4], 128
    $region97: #{tpu_custom_call.1} parent=1 // pred_fallthru
      _
    // Predicated region
    $region98: #{tpu_custom_call.1} parent=1 // pred_check
      _
    $region99: #{tpu_custom_call.1} parent=1 // pred_check_branch
      %2129 = sbr.rel (0) target = $region101
    $region100: #{tpu_custom_call.1} parent=1 // pred_region
      %2130 = dma.done [#allocation21], 256
    $region101: #{tpu_custom_call.1} parent=1 // pred_fallthru
      _
    // Predicated region
    $region102: #{tpu_custom_call.1} parent=1 // pred_check
      _
    $region103: #{tpu_custom_call.1} parent=1 // pred_check_branch
      %2132 = sbr.rel (0) target = $region105
    $region104: #{tpu_custom_call.1} parent=1 // pred_region
      %2133 = dma.done [#allocation21], 256
    $region105: #{tpu_custom_call.1} parent=1 // pred_fallthru
      _
    %2134 = vsyncpa [#allocation3], 1
    %2135 = vsyncpa [#allocation6], 1
    %2136 = vsyncpa [#allocation9], 1
    %2137 = vsyncpa [#allocation12], 1
    %2138 = vsyncpa [#allocation15], 1
    %2139 = vsyncpa [#allocation18], 1
    %2140 = vsyncpa [#allocation4], 1
    %2141 = vsyncpa [#allocation21], 1

</llo_original>
